<compile_context>
chip_gen: v7x
topology: tpu7x:2x2x1
jax: 0.10.0
libtpu: 0.0.40
codegen_flags: <defaults>
</compile_context>

<pallas_src>
import functools
import math

import jax
import jax.numpy as jnp
from jax.experimental import pallas as pl
from jax.experimental.pallas import tpu as pltpu

NEG_SLOPE = 0.01   # nn.LeakyReLU() default negative_slope
TAU = 1.0          # F.gumbel_softmax default temperature


def _fused_forward_kernel(p_ref,      # (1, CK, M) bf16  im2col patches, batch b
                          g_ref,      # (1, 1,  M) f32   Gumbel(0,1) noise, batch b
                          w1_ref,     # (C1, CK)   bf16  conv1 weight (im2col layout)
                          w2_ref,     # (C1, C1)   bf16  conv2 (1x1) weight
                          wh_ref,     # (CH, C1)   bf16  [conv_a | conv_r | conv_z | 0-pad]
                          b_ref,      # (C1, 3)    f32   col0 = b1, col1 = b2, col2 = bh
                          attn_ref,   # out (1, 1,  M) f32
                          asamp_ref,  # out (1, 1,  M) f32
                          theta_ref,  # out (1, 2,  M) f32
                          z_ref,      # out (1, 2L, M) f32
                          *, n_z):
    ch = wh_ref.shape[0]

    # conv1 (im2col GEMM) + bias + LeakyReLU  (MXU, f32 accumulation)
    x1 = jnp.dot(w1_ref[...], p_ref[0], preferred_element_type=jnp.float32)
    x1 = x1 + b_ref[:, 0:1]
    x1 = jnp.maximum(x1, NEG_SLOPE * x1).astype(jnp.bfloat16)

    # conv2 (1x1 GEMM) + bias + LeakyReLU
    h = jnp.dot(w2_ref[...], x1, preferred_element_type=jnp.float32)
    h = h + b_ref[:, 1:2]
    h = jnp.maximum(h, NEG_SLOPE * h).astype(jnp.bfloat16)

    # conv_a / conv_r / conv_z fused into one small head GEMM
    heads = jnp.dot(wh_ref[...], h, preferred_element_type=jnp.float32)
    heads = heads + b_ref[0:ch, 2:3]

    attn = heads[0:1, :]
    attn_ref[0] = attn
    theta_ref[0] = heads[1:3, :]
    z_ref[0] = heads[3:3 + n_z, :]

    # gumbel-softmax over the flattened attention logits of this batch element
    y = (attn + g_ref[0]) * jnp.float32(1.0 / TAU)
    y = y - jnp.max(y, axis=-1, keepdims=True)
    e = jnp.exp(y)
    asamp_ref[0] = e / jnp.sum(e, axis=-1, keepdims=True)


@functools.partial(jax.jit, static_argnames=("latent_dim",))
def inference_forward(x, params, key, *, latent_dim):
    """Forward of InferenceNetwork_AttentionTranslation_UnimodalRotation (groupconv=0).

    x: (B, C_in, H, W) f32.  Returns (attn, a_sampled, theta, z) in PyTorch layouts.
    """
    w1, b1, w2, b2, wa, ba, wr, br, wz, bz = params
    B, C_in, H, W = x.shape
    C1, _, Kh, Kw = w1.shape
    pad = Kh // 2
    Ho = H + 2 * pad - Kh + 1
    Wo = W + 2 * pad - Kw + 1
    M = Ho * Wo
    CK = C_in * Kh * Kw
    L2 = 2 * latent_dim
    n_heads = 1 + 2 + L2
    CH = ((n_heads + 7) // 8) * 8
    assert n_heads <= C1 and wz.shape[0] == L2

    # ---- im2col in a single XLA op (channel-major, (kh,kw)-minor ordering) ----
    patches = jax.lax.conv_general_dilated_patches(
        x, filter_shape=(Kh, Kw), window_strides=(1, 1),
        padding=((pad, pad), (pad, pad)),
        dimension_numbers=("NCHW", "OIHW", "NCHW"))       # (B, CK, Ho, Wo)
    patches = patches.reshape(B, CK, M).astype(jnp.bfloat16)

    # Gumbel(0,1) noise for F.gumbel_softmax (generated host-side: the on-chip
    # PRNG primitives have no CPU/interpret lowering).
    gumbel = jax.random.gumbel(key, (B, 1, M), jnp.float32)

    # ---- tiny weight repacks (would be done once in a real model) ----
    w1m = w1.reshape(C1, CK).astype(jnp.bfloat16)
    w2m = w2.reshape(C1, C1).astype(jnp.bfloat16)
    wh = jnp.concatenate([wa.reshape(1, C1), wr.reshape(2, C1),
                          wz.reshape(L2, C1)], axis=0)
    wh = jnp.pad(wh, ((0, CH - n_heads), (0, 0))).astype(jnp.bfloat16)
    bh = jnp.pad(jnp.concatenate([ba, br, bz]), (0, C1 - n_heads))
    b_all = jnp.stack([b1, b2, bh], axis=1).astype(jnp.float32)     # (C1, 3)

    flops = 2 * B * M * (C1 * CK + C1 * C1 + CH * C1)
    bytes_accessed = ((B * CK * M + C1 * CK + C1 * C1 + CH * C1) * 2
                      + B * M * 4 + C1 * 3 * 4
                      + B * M * 4 * (1 + 1 + 2 + L2))

    attn, a_samp, theta, z = pl.pallas_call(
        functools.partial(_fused_forward_kernel, n_z=L2),
        out_shape=(
            jax.ShapeDtypeStruct((B, 1, M), jnp.float32),    # attn
            jax.ShapeDtypeStruct((B, 1, M), jnp.float32),    # a_sampled
            jax.ShapeDtypeStruct((B, 2, M), jnp.float32),    # theta
            jax.ShapeDtypeStruct((B, L2, M), jnp.float32),   # z
        ),
        grid=(B,),
        in_specs=[
            pl.BlockSpec((1, CK, M), lambda b: (b, 0, 0)),
            pl.BlockSpec((1, 1, M), lambda b: (b, 0, 0)),
            pl.BlockSpec((C1, CK), lambda b: (0, 0)),
            pl.BlockSpec((C1, C1), lambda b: (0, 0)),
            pl.BlockSpec((CH, C1), lambda b: (0, 0)),
            pl.BlockSpec((C1, 3), lambda b: (0, 0)),
        ],
        out_specs=(
            pl.BlockSpec((1, 1, M), lambda b: (b, 0, 0)),
            pl.BlockSpec((1, 1, M), lambda b: (b, 0, 0)),
            pl.BlockSpec((1, 2, M), lambda b: (b, 0, 0)),
            pl.BlockSpec((1, L2, M), lambda b: (b, 0, 0)),
        ),
        compiler_params=pltpu.CompilerParams(
            dimension_semantics=("parallel",),       # batch across v7x's 2 TCs
            vmem_limit_bytes=32 * 1024 * 1024,
        ),
        cost_estimate=pl.CostEstimate(
            flops=flops, transcendentals=B * M, bytes_accessed=bytes_accessed),
    )(patches, gumbel, w1m, w2m, wh, b_all)

    # Only contiguity-preserving reshapes remain outside the kernel.
    attn = attn.reshape(B, 1, Ho, Wo)
    a_sampled = a_samp.reshape(B, Ho, Wo)
    theta = theta.reshape(B, 2, Ho, Wo)
    z = z.reshape(B, L2, Ho, Wo)
    return attn, a_sampled, theta, z


def _reference(x, params, latent_dim):
    """Pure-JAX f32 reference of the deterministic part (attn, theta, z)."""
    w1, b1, w2, b2, wa, ba, wr, br, wz, bz = params
    pad = w1.shape[2] // 2
    y = jax.lax.conv_general_dilated(
        x, w1, window_strides=(1, 1), padding=((pad, pad), (pad, pad)),
        dimension_numbers=("NCHW", "OIHW", "NCHW"),
        precision=jax.lax.Precision.HIGHEST)
    y = y + b1[None, :, None, None]
    y = jnp.where(y > 0, y, NEG_SLOPE * y)

    def conv1x1(w, b, t):
        o = jnp.einsum("oc,bchw->bohw", w.reshape(w.shape[0], -1), t,
                       precision=jax.lax.Precision.HIGHEST)
        return o + b[None, :, None, None]

    h = conv1x1(w2, b2, y)
    h = jnp.where(h > 0, h, NEG_SLOPE * h)
    return conv1x1(wa, ba, h), conv1x1(wr, br, h), conv1x1(wz, bz, h)


if __name__ == "__main__":
    # Module defaults: kernels_num=128, activation=LeakyReLU, groupconv=0.
    B, C_in, n, latent_dim = 2, 1, 16, 2       # n = input_size = kernel_size = 16
    kernels_num = 128

    key = jax.random.PRNGKey(0)
    kx, k1, k2, k3, k4, k5, kg = jax.random.split(key, 7)

    def conv_params(k, c_out, c_in, kh, kw):
        ka, kb = jax.random.split(k)
        s = 1.0 / math.sqrt(c_in * kh * kw)
        w = jax.random.uniform(ka, (c_out, c_in, kh, kw), jnp.float32, -s, s)
        b = jax.random.uniform(kb, (c_out,), jnp.float32, -s, s)
        return w, b

    w1, b1 = conv_params(k1, kernels_num, C_in, n, n)
    w2, b2 = conv_params(k2, kernels_num, kernels_num, 1, 1)
    wa, ba = conv_params(k3, 1, kernels_num, 1, 1)
    wr, br = conv_params(k4, 2, kernels_num, 1, 1)
    wz, bz = conv_params(k5, 2 * latent_dim, kernels_num, 1, 1)
    params = (w1, b1, w2, b2, wa, ba, wr, br, wz, bz)

    x = jax.random.normal(kx, (B, C_in, n, n), jnp.float32)

    attn, a_sampled, theta, z = jax.block_until_ready(
        inference_forward(x, params, kg, latent_dim=latent_dim))

    Ho = Wo = n + 2 * (n // 2) - n + 1          # 17
    assert attn.shape == (B, 1, Ho, Wo)
    assert a_sampled.shape == (B, Ho, Wo)
    assert theta.shape == (B, 2, Ho, Wo)
    assert z.shape == (B, 2 * latent_dim, Ho, Wo)

    attn_r, theta_r, z_r = _reference(x, params, latent_dim)
    assert jnp.allclose(attn, attn_r, rtol=2e-2, atol=2e-2)
    assert jnp.allclose(theta, theta_r, rtol=2e-2, atol=2e-2)
    assert jnp.allclose(z, z_r, rtol=2e-2, atol=2e-2)

    # gumbel-softmax output: valid probability map per batch element
    assert bool(jnp.all(jnp.isfinite(a_sampled)))
    assert bool(jnp.all(a_sampled >= 0.0))
    assert bool(jnp.all(jnp.abs(a_sampled.reshape(B, -1).sum(axis=-1) - 1.0) < 1e-3))

    print("KERNEL_OK")
</pallas_src>

<mosaic_0001>
module attributes {stable_mosaic.version = 11 : i64} {
  func.func @_fused_forward_kernel(%arg0: i32, %arg1: memref<1x256x289xbf16, #tpu.memory_space<vmem>>, %arg2: memref<1x1x289xf32, #tpu.memory_space<vmem>>, %arg3: memref<128x256xbf16, #tpu.memory_space<vmem>>, %arg4: memref<128x128xbf16, #tpu.memory_space<vmem>>, %arg5: memref<8x128xbf16, #tpu.memory_space<vmem>>, %arg6: memref<128x3xf32, #tpu.memory_space<vmem>>, %arg7: memref<1x1x289xf32, #tpu.memory_space<vmem>>, %arg8: memref<1x1x289xf32, #tpu.memory_space<vmem>>, %arg9: memref<1x2x289xf32, #tpu.memory_space<vmem>>, %arg10: memref<1x4x289xf32, #tpu.memory_space<vmem>>) attributes {dimension_semantics = [#tpu.dimension_semantics<parallel>], iteration_bounds = array<i64: 2>, scalar_prefetch = 0 : i64, scratch_operands = 0 : i64, tpu.core_type = #tpu.core_type<tc>, window_params = [{transform_indices = @transform_0, window_bounds = array<i64: 1, 256, 289>}, {transform_indices = @transform_1, window_bounds = array<i64: 1, 1, 289>}, {pipeline_mode = #tpu.pipeline_mode<synchronous>, transform_indices = @transform_2, window_bounds = array<i64: 128, 256>}, {pipeline_mode = #tpu.pipeline_mode<synchronous>, transform_indices = @transform_3, window_bounds = array<i64: 128, 128>}, {pipeline_mode = #tpu.pipeline_mode<synchronous>, transform_indices = @transform_4, window_bounds = array<i64: 8, 128>}, {pipeline_mode = #tpu.pipeline_mode<synchronous>, transform_indices = @transform_5, window_bounds = array<i64: 128, 3>}, {transform_indices = @transform_6, window_bounds = array<i64: 1, 1, 289>}, {transform_indices = @transform_7, window_bounds = array<i64: 1, 1, 289>}, {transform_indices = @transform_8, window_bounds = array<i64: 1, 2, 289>}, {transform_indices = @transform_9, window_bounds = array<i64: 1, 4, 289>}]} {
    %c0 = arith.constant 0 : index
    %c0_0 = arith.constant 0 : index
    %0 = vector.load %arg3[%c0, %c0_0] : memref<128x256xbf16, #tpu.memory_space<vmem>>, vector<128x256xbf16>
    %c0_1 = arith.constant 0 : index
    %c0_2 = arith.constant 0 : index
    %c0_3 = arith.constant 0 : index
    %1 = vector.load %arg1[%c0_1, %c0_2, %c0_3] : memref<1x256x289xbf16, #tpu.memory_space<vmem>>, vector<1x256x289xbf16>
    %2 = vector.shape_cast %1 : vector<1x256x289xbf16> to vector<256x289xbf16>
    %cst = arith.constant dense<0.000000e+00> : vector<128x289xf32>
    %3 = tpu.matmul %0, %2, %cst {dimension_numbers = #tpu.dot_dimension_numbers<[1], [0], [0], [1], [0, 0, 1, 1], [], []>} : vector<128x256xbf16>, vector<256x289xbf16>, vector<128x289xf32> -> vector<128x289xf32>
    %c0_4 = arith.constant 0 : index
    %c0_5 = arith.constant 0 : index
    %4 = vector.load %arg6[%c0_4, %c0_5] : memref<128x3xf32, #tpu.memory_space<vmem>>, vector<128x1xf32>
    %5 = vector.broadcast %4 : vector<128x1xf32> to vector<128x289xf32>
    %6 = arith.addf %3, %5 : vector<128x289xf32>
    %cst_6 = arith.constant 0.00999999977 : f32
    %7 = vector.broadcast %cst_6 : f32 to vector<128x289xf32>
    %8 = arith.mulf %7, %6 : vector<128x289xf32>
    %9 = arith.maximumf %6, %8 : vector<128x289xf32>
    %10 = arith.truncf %9 : vector<128x289xf32> to vector<128x289xbf16>
    %c0_7 = arith.constant 0 : index
    %c0_8 = arith.constant 0 : index
    %11 = vector.load %arg4[%c0_7, %c0_8] : memref<128x128xbf16, #tpu.memory_space<vmem>>, vector<128x128xbf16>
    %cst_9 = arith.constant dense<0.000000e+00> : vector<128x289xf32>
    %12 = tpu.matmul %11, %10, %cst_9 {dimension_numbers = #tpu.dot_dimension_numbers<[1], [0], [0], [1], [0, 0, 1, 1], [], []>} : vector<128x128xbf16>, vector<128x289xbf16>, vector<128x289xf32> -> vector<128x289xf32>
    %c0_10 = arith.constant 0 : index
    %c1 = arith.constant 1 : index
    %13 = vector.load %arg6[%c0_10, %c1] : memref<128x3xf32, #tpu.memory_space<vmem>>, vector<128x1xf32>
    %14 = vector.broadcast %13 : vector<128x1xf32> to vector<128x289xf32>
    %15 = arith.addf %12, %14 : vector<128x289xf32>
    %cst_11 = arith.constant 0.00999999977 : f32
    %16 = vector.broadcast %cst_11 : f32 to vector<128x289xf32>
    %17 = arith.mulf %16, %15 : vector<128x289xf32>
    %18 = arith.maximumf %15, %17 : vector<128x289xf32>
    %19 = arith.truncf %18 : vector<128x289xf32> to vector<128x289xbf16>
    %c0_12 = arith.constant 0 : index
    %c0_13 = arith.constant 0 : index
    %20 = vector.load %arg5[%c0_12, %c0_13] : memref<8x128xbf16, #tpu.memory_space<vmem>>, vector<8x128xbf16>
    %cst_14 = arith.constant dense<0.000000e+00> : vector<8x289xf32>
    %21 = tpu.matmul %20, %19, %cst_14 {dimension_numbers = #tpu.dot_dimension_numbers<[1], [0], [0], [1], [0, 0, 1, 1], [], []>} : vector<8x128xbf16>, vector<128x289xbf16>, vector<8x289xf32> -> vector<8x289xf32>
    %c0_15 = arith.constant 0 : index
    %c2 = arith.constant 2 : index
    %22 = vector.load %arg6[%c0_15, %c2] : memref<128x3xf32, #tpu.memory_space<vmem>>, vector<8x1xf32>
    %23 = vector.broadcast %22 : vector<8x1xf32> to vector<8x289xf32>
    %24 = arith.addf %21, %23 : vector<8x289xf32>
    %25 = vector.extract_strided_slice %24 {offsets = [0, 0], sizes = [1, 289], strides = [1, 1]} : vector<8x289xf32> to vector<1x289xf32>
    %c0_16 = arith.constant 0 : index
    %c0_17 = arith.constant 0 : index
    %c0_18 = arith.constant 0 : index
    %26 = vector.load %arg7[%c0_16, %c0_17, %c0_18] : memref<1x1x289xf32, #tpu.memory_space<vmem>>, vector<1x1x289xf32>
    %27 = vector.shape_cast %26 : vector<1x1x289xf32> to vector<1x289xf32>
    %28 = vector.shape_cast %25 : vector<1x289xf32> to vector<1x1x289xf32>
    tpu.vector_store %arg7[%c0_16, %c0_17, %c0_18], %28 {strides = array<i32>} : memref<1x1x289xf32, #tpu.memory_space<vmem>>, vector<1x1x289xf32>,
    %29 = vector.extract_strided_slice %24 {offsets = [1, 0], sizes = [2, 289], strides = [1, 1]} : vector<8x289xf32> to vector<2x289xf32>
    %c0_19 = arith.constant 0 : index
    %c0_20 = arith.constant 0 : index
    %c0_21 = arith.constant 0 : index
    %30 = vector.load %arg9[%c0_19, %c0_20, %c0_21] : memref<1x2x289xf32, #tpu.memory_space<vmem>>, vector<1x2x289xf32>
    %31 = vector.shape_cast %30 : vector<1x2x289xf32> to vector<2x289xf32>
    %32 = vector.shape_cast %29 : vector<2x289xf32> to vector<1x2x289xf32>
    tpu.vector_store %arg9[%c0_19, %c0_20, %c0_21], %32 {strides = array<i32>} : memref<1x2x289xf32, #tpu.memory_space<vmem>>, vector<1x2x289xf32>,
    %33 = vector.extract_strided_slice %24 {offsets = [3, 0], sizes = [4, 289], strides = [1, 1]} : vector<8x289xf32> to vector<4x289xf32>
    %c0_22 = arith.constant 0 : index
    %c0_23 = arith.constant 0 : index
    %c0_24 = arith.constant 0 : index
    %34 = vector.load %arg10[%c0_22, %c0_23, %c0_24] : memref<1x4x289xf32, #tpu.memory_space<vmem>>, vector<1x4x289xf32>
    %35 = vector.shape_cast %34 : vector<1x4x289xf32> to vector<4x289xf32>
    %36 = vector.shape_cast %33 : vector<4x289xf32> to vector<1x4x289xf32>
    tpu.vector_store %arg10[%c0_22, %c0_23, %c0_24], %36 {strides = array<i32>} : memref<1x4x289xf32, #tpu.memory_space<vmem>>, vector<1x4x289xf32>,
    %c0_25 = arith.constant 0 : index
    %c0_26 = arith.constant 0 : index
    %c0_27 = arith.constant 0 : index
    %37 = vector.load %arg2[%c0_25, %c0_26, %c0_27] : memref<1x1x289xf32, #tpu.memory_space<vmem>>, vector<1x1x289xf32>
    %38 = vector.shape_cast %37 : vector<1x1x289xf32> to vector<1x289xf32>
    %39 = arith.addf %25, %38 : vector<1x289xf32>
    %cst_28 = arith.constant 1.000000e+00 : f32
    %40 = vector.broadcast %cst_28 : f32 to vector<1x289xf32>
    %41 = arith.mulf %39, %40 : vector<1x289xf32>
    %cst_29 = arith.constant dense<0xFF800000> : vector<1xf32>
    %42 = vector.multi_reduction <maximumf>, %41, %cst_29 [1] : vector<1x289xf32> to vector<1xf32>
    %43 = vector.shape_cast %42 : vector<1xf32> to vector<1x1xf32>
    %44 = vector.broadcast %43 : vector<1x1xf32> to vector<1x289xf32>
    %45 = arith.subf %41, %44 : vector<1x289xf32>
    %46 = math.exp %45 : vector<1x289xf32>
    %cst_30 = arith.constant dense<0.000000e+00> : vector<1xf32>
    %47 = vector.multi_reduction <add>, %46, %cst_30 [1] : vector<1x289xf32> to vector<1xf32>
    %48 = vector.shape_cast %47 : vector<1xf32> to vector<1x1xf32>
    %49 = vector.broadcast %48 : vector<1x1xf32> to vector<1x289xf32>
    %50 = arith.divf %46, %49 : vector<1x289xf32>
    %c0_31 = arith.constant 0 : index
    %c0_32 = arith.constant 0 : index
    %c0_33 = arith.constant 0 : index
    %51 = vector.load %arg8[%c0_31, %c0_32, %c0_33] : memref<1x1x289xf32, #tpu.memory_space<vmem>>, vector<1x1x289xf32>
    %52 = vector.shape_cast %51 : vector<1x1x289xf32> to vector<1x289xf32>
    %53 = vector.shape_cast %50 : vector<1x289xf32> to vector<1x1x289xf32>
    tpu.vector_store %arg8[%c0_31, %c0_32, %c0_33], %53 {strides = array<i32>} : memref<1x1x289xf32, #tpu.memory_space<vmem>>, vector<1x1x289xf32>,
    return
  }
  func.func @transform_0(%arg0: i32) -> (i32, i32, i32) {
    %c0_i32 = arith.constant 0 : i32
    %c0_i32_0 = arith.constant 0 : i32
    %c0_i32_1 = arith.constant 0 : i32
    return %arg0, %c0_i32, %c0_i32_0 : i32, i32, i32
  }
  func.func @transform_1(%arg0: i32) -> (i32, i32, i32) {
    %c0_i32 = arith.constant 0 : i32
    %c0_i32_0 = arith.constant 0 : i32
    %c0_i32_1 = arith.constant 0 : i32
    return %arg0, %c0_i32, %c0_i32_0 : i32, i32, i32
  }
  func.func @transform_2(%arg0: i32) -> (i32, i32) {
    %c0_i32 = arith.constant 0 : i32
    %c0_i32_0 = arith.constant 0 : i32
    %c0_i32_1 = arith.constant 0 : i32
    return %c0_i32, %c0_i32_0 : i32, i32
  }
  func.func @transform_3(%arg0: i32) -> (i32, i32) {
    %c0_i32 = arith.constant 0 : i32
    %c0_i32_0 = arith.constant 0 : i32
    %c0_i32_1 = arith.constant 0 : i32
    return %c0_i32, %c0_i32_0 : i32, i32
  }
  func.func @transform_4(%arg0: i32) -> (i32, i32) {
    %c0_i32 = arith.constant 0 : i32
    %c0_i32_0 = arith.constant 0 : i32
    %c0_i32_1 = arith.constant 0 : i32
    return %c0_i32, %c0_i32_0 : i32, i32
  }
  func.func @transform_5(%arg0: i32) -> (i32, i32) {
    %c0_i32 = arith.constant 0 : i32
    %c0_i32_0 = arith.constant 0 : i32
    %c0_i32_1 = arith.constant 0 : i32
    return %c0_i32, %c0_i32_0 : i32, i32
  }
  func.func @transform_6(%arg0: i32) -> (i32, i32, i32) {
    %c0_i32 = arith.constant 0 : i32
    %c0_i32_0 = arith.constant 0 : i32
    %c0_i32_1 = arith.constant 0 : i32
    return %arg0, %c0_i32, %c0_i32_0 : i32, i32, i32
  }
  func.func @transform_7(%arg0: i32) -> (i32, i32, i32) {
    %c0_i32 = arith.constant 0 : i32
    %c0_i32_0 = arith.constant 0 : i32
    %c0_i32_1 = arith.constant 0 : i32
    return %arg0, %c0_i32, %c0_i32_0 : i32, i32, i32
  }
  func.func @transform_8(%arg0: i32) -> (i32, i32, i32) {
    %c0_i32 = arith.constant 0 : i32
    %c0_i32_0 = arith.constant 0 : i32
    %c0_i32_1 = arith.constant 0 : i32
    return %arg0, %c0_i32, %c0_i32_0 : i32, i32, i32
  }
  func.func @transform_9(%arg0: i32) -> (i32, i32, i32) {
    %c0_i32 = arith.constant 0 : i32
    %c0_i32_0 = arith.constant 0 : i32
    %c0_i32_1 = arith.constant 0 : i32
    return %arg0, %c0_i32, %c0_i32_0 : i32, i32, i32
  }
}

</mosaic_0001>

<llo_original>
// kernel: inference_forward.1
$region0: #{inference_forward.1}
  #allocation0 [shape = 'u32[]', space=smem, size = 0x4, offset = 0x4, fixed_abs, tag = 'smem constant byte address 0x4 - core index']
  #allocation1 [shape = 'u32[144,128]{1,0:T(1,128)}', space=vmem, size = 0x12000, scoped, tag = 'internal scratch']
  %s0 = inlined_call_operand.vmem [shape: bf16[2,256,289], index: 0, kind: input, shape index: {}]
  %s1 = inlined_call_operand.vmem [shape: f32[2,1,289], index: 1, kind: input, shape index: {}]
  %s2 = inlined_call_operand.vmem [shape: bf16[128,256], index: 2, kind: input, shape index: {}]
  %s3 = inlined_call_operand.vmem [shape: bf16[128,128], index: 3, kind: input, shape index: {}]
  %s4 = inlined_call_operand.vmem [shape: bf16[8,128], index: 4, kind: input, shape index: {}]
  %s5 = inlined_call_operand.vmem [shape: f32[128,3], index: 5, kind: input, shape index: {}]
  %s6 = inlined_call_operand.vmem [shape: f32[2,1,289], index: 6, kind: output, shape index: {0}]
  %s7 = inlined_call_operand.vmem [shape: f32[2,1,289], index: 7, kind: output, shape index: {1}]
  %s8 = inlined_call_operand.vmem [shape: f32[2,2,289], index: 8, kind: output, shape index: {2}]
  %s9 = inlined_call_operand.vmem [shape: f32[2,4,289], index: 9, kind: output, shape index: {3}]
  %10 = xla_tuple %s6, %s7, %s8, %s9
  %s11 = sld [smem:[#allocation0]]
  $region81: #{inference_forward.1} parent=0
    _
  %s13 = ssub.s32 1, %s11
  %s14 = scalar_select 0, %s13, %s11
  loop: start=0, step=1, limit=4
  $region2: #{inference_forward.1} parent=0 // loop_pre_header
    _
  $region3: #{inference_forward.1} parent=0 // loop_header
    %s16 = sphi 0, %s20
    %p17 = scmp.ge.s32.totalorder %s16, 4
    %s26 = sphi 0, %s28
    %s29 = sphi 0, %s26
    %s30 = sphi 0, %s29
    %s46 = sphi 0, %s30
    %s52 = sphi 0, %s54
    %s55 = sphi 0, %s52
    %s56 = sphi 0, %s55
    %s72 = sphi 0, %s56
    %s76 = sphi 0, %s76
    %s78 = sphi 0, %s76
    %s79 = sphi 0, %s78
    %s93 = sphi 0, %s79
    %s97 = sphi 0, %s97
    %s99 = sphi 0, %s97
    %s100 = sphi 0, %s99
    %s114 = sphi 0, %s100
    %s118 = sphi 0, %s118
    %s120 = sphi 0, %s118
    %s121 = sphi 0, %s120
    %s135 = sphi 0, %s121
    %s139 = sphi 0, %s139
    %s141 = sphi 0, %s139
    %s142 = sphi 0, %s141
    %s156 = sphi 0, %s142
    %s162 = sphi 0, %s164
    %s165 = sphi 0, %s162
    %s166 = sphi 0, %s165
    %s182 = sphi 0, %s166
    %s188 = sphi 0, %s190
    %s191 = sphi 0, %s188
    %s192 = sphi 0, %s191
    %s208 = sphi 0, %s192
    %s214 = sphi 0, %s216
    %s217 = sphi 0, %s214
    %s218 = sphi 0, %s217
    %s234 = sphi 0, %s218
    %s240 = sphi 0, %s242
    %s243 = sphi 0, %s240
    %s244 = sphi 0, %s243
    %s260 = sphi 0, %s244
  $region4: #{inference_forward.1} parent=0 // loop_header_branch
    %19 = sbr.rel (%p17) target = $region8
  $region5: #{inference_forward.1} parent=0 // loop_body
    %s21 = ssub.s32 %s16, 1
    %s22 = ssub.s32 %s16, 2
    %s23 = sadd.s32 %s16, 1
    %s24 = ssub.s32 %s16, %s23
    %p25 = scmp.eq.s32.totalorder %s24, 0
    %s27 = sadd.s32 %s26, 1
    %s28 = scalar_select %p25, %s26, %s27
    %p31 = pneg %p25
    %p32 = scmp.eq.s32.totalorder %s16, 1
    %p33 = por %p31, %p32
    %p34 = scmp.ne.s32.totalorder %s26, %s29
    %p35 = scmp.eq.s32.totalorder %s16, 0
    %p36 = por %p34, %p35
    %p37 = scmp.ne.s32.totalorder %s26, %s29
    %p38 = scmp.eq.s32.totalorder %s21, 1
    %p39 = por %p37, %p38
    %p40 = scmp.ne.s32.totalorder %s29, %s30
    %p41 = scmp.eq.s32.totalorder %s21, 0
    %p42 = por %p40, %p41
    %p43 = scmp.ne.s32.totalorder %s29, %s30
    %p44 = scmp.eq.s32.totalorder %s22, 1
    %p45 = por %p43, %p44
    %p47 = scmp.ne.s32.totalorder %s30, %s46
    %p48 = scmp.eq.s32.totalorder %s22, 0
    %p49 = por %p47, %p48
    %s50 = ssub.s32 %s16, %s23
    %p51 = scmp.eq.s32.totalorder %s50, 0
    %s53 = sadd.s32 %s52, 1
    %s54 = scalar_select %p51, %s52, %s53
    %p57 = pneg %p51
    %p58 = scmp.eq.s32.totalorder %s16, 1
    %p59 = por %p57, %p58
    %p60 = scmp.ne.s32.totalorder %s52, %s55
    %p61 = scmp.eq.s32.totalorder %s16, 0
    %p62 = por %p60, %p61
    %p63 = scmp.ne.s32.totalorder %s52, %s55
    %p64 = scmp.eq.s32.totalorder %s21, 1
    %p65 = por %p63, %p64
    %p66 = scmp.ne.s32.totalorder %s55, %s56
    %p67 = scmp.eq.s32.totalorder %s21, 0
    %p68 = por %p66, %p67
    %p69 = scmp.ne.s32.totalorder %s55, %s56
    %p70 = scmp.eq.s32.totalorder %s22, 1
    %p71 = por %p69, %p70
    %p73 = scmp.ne.s32.totalorder %s56, %s72
    %p74 = scmp.eq.s32.totalorder %s22, 0
    %p75 = por %p73, %p74
    %s77 = sadd.s32 %s76, 1
    %p80 = scmp.eq.s32.totalorder %s16, 1
    %p81 = scmp.ne.s32.totalorder %s76, %s78
    %p82 = scmp.eq.s32.totalorder %s16, 0
    %p83 = por %p81, %p82
    %p84 = scmp.ne.s32.totalorder %s76, %s78
    %p85 = scmp.eq.s32.totalorder %s21, 1
    %p86 = por %p84, %p85
    %p87 = scmp.ne.s32.totalorder %s78, %s79
    %p88 = scmp.eq.s32.totalorder %s21, 0
    %p89 = por %p87, %p88
    %p90 = scmp.ne.s32.totalorder %s78, %s79
    %p91 = scmp.eq.s32.totalorder %s22, 1
    %p92 = por %p90, %p91
    %p94 = scmp.ne.s32.totalorder %s79, %s93
    %p95 = scmp.eq.s32.totalorder %s22, 0
    %p96 = por %p94, %p95
    %s98 = sadd.s32 %s97, 1
    %p101 = scmp.eq.s32.totalorder %s16, 1
    %p102 = scmp.ne.s32.totalorder %s97, %s99
    %p103 = scmp.eq.s32.totalorder %s16, 0
    %p104 = por %p102, %p103
    %p105 = scmp.ne.s32.totalorder %s97, %s99
    %p106 = scmp.eq.s32.totalorder %s21, 1
    %p107 = por %p105, %p106
    %p108 = scmp.ne.s32.totalorder %s99, %s100
    %p109 = scmp.eq.s32.totalorder %s21, 0
    %p110 = por %p108, %p109
    %p111 = scmp.ne.s32.totalorder %s99, %s100
    %p112 = scmp.eq.s32.totalorder %s22, 1
    %p113 = por %p111, %p112
    %p115 = scmp.ne.s32.totalorder %s100, %s114
    %p116 = scmp.eq.s32.totalorder %s22, 0
    %p117 = por %p115, %p116
    %s119 = sadd.s32 %s118, 1
    %p122 = scmp.eq.s32.totalorder %s16, 1
    %p123 = scmp.ne.s32.totalorder %s118, %s120
    %p124 = scmp.eq.s32.totalorder %s16, 0
    %p125 = por %p123, %p124
    %p126 = scmp.ne.s32.totalorder %s118, %s120
    %p127 = scmp.eq.s32.totalorder %s21, 1
    %p128 = por %p126, %p127
    %p129 = scmp.ne.s32.totalorder %s120, %s121
    %p130 = scmp.eq.s32.totalorder %s21, 0
    %p131 = por %p129, %p130
    %p132 = scmp.ne.s32.totalorder %s120, %s121
    %p133 = scmp.eq.s32.totalorder %s22, 1
    %p134 = por %p132, %p133
    %p136 = scmp.ne.s32.totalorder %s121, %s135
    %p137 = scmp.eq.s32.totalorder %s22, 0
    %p138 = por %p136, %p137
    %s140 = sadd.s32 %s139, 1
    %p143 = scmp.eq.s32.totalorder %s16, 1
    %p144 = scmp.ne.s32.totalorder %s139, %s141
    %p145 = scmp.eq.s32.totalorder %s16, 0
    %p146 = por %p144, %p145
    %p147 = scmp.ne.s32.totalorder %s139, %s141
    %p148 = scmp.eq.s32.totalorder %s21, 1
    %p149 = por %p147, %p148
    %p150 = scmp.ne.s32.totalorder %s141, %s142
    %p151 = scmp.eq.s32.totalorder %s21, 0
    %p152 = por %p150, %p151
    %p153 = scmp.ne.s32.totalorder %s141, %s142
    %p154 = scmp.eq.s32.totalorder %s22, 1
    %p155 = por %p153, %p154
    %p157 = scmp.ne.s32.totalorder %s142, %s156
    %p158 = scmp.eq.s32.totalorder %s22, 0
    %p159 = por %p157, %p158
    %s160 = ssub.s32 %s16, %s23
    %p161 = scmp.eq.s32.totalorder %s160, 0
    %s163 = sadd.s32 %s162, 1
    %s164 = scalar_select %p161, %s162, %s163
    %p167 = pneg %p161
    %p168 = scmp.eq.s32.totalorder %s16, 1
    %p169 = por %p167, %p168
    %p170 = scmp.ne.s32.totalorder %s162, %s165
    %p171 = scmp.eq.s32.totalorder %s16, 0
    %p172 = por %p170, %p171
    %p173 = scmp.ne.s32.totalorder %s162, %s165
    %p174 = scmp.eq.s32.totalorder %s21, 1
    %p175 = por %p173, %p174
    %p176 = scmp.ne.s32.totalorder %s165, %s166
    %p177 = scmp.eq.s32.totalorder %s21, 0
    %p178 = por %p176, %p177
    %p179 = scmp.ne.s32.totalorder %s165, %s166
    %p180 = scmp.eq.s32.totalorder %s22, 1
    %p181 = por %p179, %p180
    %p183 = scmp.ne.s32.totalorder %s166, %s182
    %p184 = scmp.eq.s32.totalorder %s22, 0
    %p185 = por %p183, %p184
    %s186 = ssub.s32 %s16, %s23
    %p187 = scmp.eq.s32.totalorder %s186, 0
    %s189 = sadd.s32 %s188, 1
    %s190 = scalar_select %p187, %s188, %s189
    %p193 = pneg %p187
    %p194 = scmp.eq.s32.totalorder %s16, 1
    %p195 = por %p193, %p194
    %p196 = scmp.ne.s32.totalorder %s188, %s191
    %p197 = scmp.eq.s32.totalorder %s16, 0
    %p198 = por %p196, %p197
    %p199 = scmp.ne.s32.totalorder %s188, %s191
    %p200 = scmp.eq.s32.totalorder %s21, 1
    %p201 = por %p199, %p200
    %p202 = scmp.ne.s32.totalorder %s191, %s192
    %p203 = scmp.eq.s32.totalorder %s21, 0
    %p204 = por %p202, %p203
    %p205 = scmp.ne.s32.totalorder %s191, %s192
    %p206 = scmp.eq.s32.totalorder %s22, 1
    %p207 = por %p205, %p206
    %p209 = scmp.ne.s32.totalorder %s192, %s208
    %p210 = scmp.eq.s32.totalorder %s22, 0
    %p211 = por %p209, %p210
    %s212 = ssub.s32 %s16, %s23
    %p213 = scmp.eq.s32.totalorder %s212, 0
    %s215 = sadd.s32 %s214, 1
    %s216 = scalar_select %p213, %s214, %s215
    %p219 = pneg %p213
    %p220 = scmp.eq.s32.totalorder %s16, 1
    %p221 = por %p219, %p220
    %p222 = scmp.ne.s32.totalorder %s214, %s217
    %p223 = scmp.eq.s32.totalorder %s16, 0
    %p224 = por %p222, %p223
    %p225 = scmp.ne.s32.totalorder %s214, %s217
    %p226 = scmp.eq.s32.totalorder %s21, 1
    %p227 = por %p225, %p226
    %p228 = scmp.ne.s32.totalorder %s217, %s218
    %p229 = scmp.eq.s32.totalorder %s21, 0
    %p230 = por %p228, %p229
    %p231 = scmp.ne.s32.totalorder %s217, %s218
    %p232 = scmp.eq.s32.totalorder %s22, 1
    %p233 = por %p231, %p232
    %p235 = scmp.ne.s32.totalorder %s218, %s234
    %p236 = scmp.eq.s32.totalorder %s22, 0
    %p237 = por %p235, %p236
    %s238 = ssub.s32 %s16, %s23
    %p239 = scmp.eq.s32.totalorder %s238, 0
    %s241 = sadd.s32 %s240, 1
    %s242 = scalar_select %p239, %s240, %s241
    %p245 = pneg %p239
    %p246 = scmp.eq.s32.totalorder %s16, 1
    %p247 = por %p245, %p246
    %p248 = scmp.ne.s32.totalorder %s240, %s243
    %p249 = scmp.eq.s32.totalorder %s16, 0
    %p250 = por %p248, %p249
    %p251 = scmp.ne.s32.totalorder %s240, %s243
    %p252 = scmp.eq.s32.totalorder %s21, 1
    %p253 = por %p251, %p252
    %p254 = scmp.ne.s32.totalorder %s243, %s244
    %p255 = scmp.eq.s32.totalorder %s21, 0
    %p256 = por %p254, %p255
    %p257 = scmp.ne.s32.totalorder %s243, %s244
    %p258 = scmp.eq.s32.totalorder %s22, 1
    %p259 = por %p257, %p258
    %p261 = scmp.ne.s32.totalorder %s244, %s260
    %p262 = scmp.eq.s32.totalorder %s22, 0
    %p263 = por %p261, %p262
    %p264 = scmp.le.s32.totalorder 1, %s16
    %p265 = scmp.lt.s32.totalorder %s16, 3
    %p266 = pnand %p264, %p265
    %p267 = pneg %p266
    // Predicated region
    $region9: #{inference_forward.1} parent=5 // pred_check
      _
    $region10: #{inference_forward.1} parent=5 // pred_check_branch
      %269 = sbr.rel (%p266) target = $region12
    $region11: #{inference_forward.1} parent=5 // pred_region
      %s270 = ssub.s32 %s16, 1
      // Predicated region
      $region13: #{inference_forward.1} parent=11 // pred_check
        %p271 = pneg %p89
      $region14: #{inference_forward.1} parent=11 // pred_check_branch
        %273 = sbr.rel (%p271) target = $region16
      $region15: #{inference_forward.1} parent=11 // pred_region
        _
      $region16: #{inference_forward.1} parent=11 // pred_fallthru
        _
      // Predicated region
      $region17: #{inference_forward.1} parent=11 // pred_check
        %p274 = pneg %p110
      $region18: #{inference_forward.1} parent=11 // pred_check_branch
        %276 = sbr.rel (%p274) target = $region20
      $region19: #{inference_forward.1} parent=11 // pred_region
        _
      $region20: #{inference_forward.1} parent=11 // pred_fallthru
        _
      // Predicated region
      $region21: #{inference_forward.1} parent=11 // pred_check
        %p277 = pneg %p131
      $region22: #{inference_forward.1} parent=11 // pred_check_branch
        %279 = sbr.rel (%p277) target = $region24
      $region23: #{inference_forward.1} parent=11 // pred_region
        _
      $region24: #{inference_forward.1} parent=11 // pred_fallthru
        _
      // Predicated region
      $region25: #{inference_forward.1} parent=11 // pred_check
        %p280 = pneg %p152
      $region26: #{inference_forward.1} parent=11 // pred_check_branch
        %282 = sbr.rel (%p280) target = $region28
      $region27: #{inference_forward.1} parent=11 // pred_region
        _
      $region28: #{inference_forward.1} parent=11 // pred_fallthru
        _
    $region12: #{inference_forward.1} parent=5 // pred_fallthru
      _
    %p283 = scmp.lt.s32.totalorder %s16, 2
    // Predicated region
    $region29: #{inference_forward.1} parent=5 // pred_check
      %p284 = pneg %p283
    $region30: #{inference_forward.1} parent=5 // pred_check_branch
      %286 = sbr.rel (%p284) target = $region32
    $region31: #{inference_forward.1} parent=5 // pred_region
      // Predicated region
      $region33: #{inference_forward.1} parent=31 // pred_check
        %p287 = pneg %p36
      $region34: #{inference_forward.1} parent=31 // pred_check_branch
        %289 = sbr.rel (%p287) target = $region36
      $region35: #{inference_forward.1} parent=31 // pred_region
        %p290 = scmp.lt.s32.totalorder %s16, 1
        %s291 = scalar_select %p290, %s16, 1
        %s292 = smul.addr %s291, 96
        %s293 = smul.addr %s292, 4
        %s294 = scalar_lea.vmem %s0, %s293
      $region36: #{inference_forward.1} parent=31 // pred_fallthru
        _
      // Predicated region
      $region37: #{inference_forward.1} parent=31 // pred_check
        %p295 = pneg %p62
      $region38: #{inference_forward.1} parent=31 // pred_check_branch
        %297 = sbr.rel (%p295) target = $region40
      $region39: #{inference_forward.1} parent=31 // pred_region
        %p298 = scmp.lt.s32.totalorder %s16, 1
        %s299 = scalar_select %p298, %s16, 1
        %s300 = smul.addr %s299, 3
        %s301 = scalar_lea.vmem %s1, %s300
      $region40: #{inference_forward.1} parent=31 // pred_fallthru
        _
    $region32: #{inference_forward.1} parent=5 // pred_fallthru
      _
    %p302 = scmp.le.s32.totalorder 1, %s16
    %p303 = scmp.lt.s32.totalorder %s16, 3
    %p304 = pnand %p302, %p303
    %p305 = pneg %p304
    // Predicated region
    $region41: #{inference_forward.1} parent=5 // pred_check
      _
    $region42: #{inference_forward.1} parent=5 // pred_check_branch
      %307 = sbr.rel (%p304) target = $region44
    $region43: #{inference_forward.1} parent=5 // pred_region
      %s308 = ssub.s32 %s16, 1
      %p309 = scmp.lt.s32.totalorder %s21, 1
      %s310 = scalar_select %p309, %s21, 1
      %s311 = smul.addr %s310, 96
      %s312 = smul.addr %s311, 4
      %s313 = scalar_lea.vmem %s0, %s312
      %p314 = pneg %p42
      %p315 = pneg %p39
      %p316 = scmp.lt.s32.totalorder %s21, 1
      %s317 = scalar_select %p316, %s21, 1
      %s318 = smul.addr %s317, 3
      %s319 = scalar_lea.vmem %s1, %s318
      %p320 = pneg %p68
      %p321 = pneg %p65
      %p322 = pneg %p89
      %p323 = pneg %p86
      %p324 = pneg %p110
      %p325 = pneg %p107
      %p326 = pneg %p131
      %p327 = pneg %p128
      %p328 = pneg %p152
      %p329 = pneg %p149
      %p330 = pneg %p178
      %p331 = pneg %p175
      %p332 = scmp.lt.s32.totalorder %s21, 1
      %s333 = scalar_select %p332, %s21, 1
      %s334 = smul.addr %s333, 3
      %s335 = scalar_lea.vmem %s6, %s334
      %p336 = pneg %p204
      %p337 = pneg %p201
      %p338 = scmp.lt.s32.totalorder %s21, 1
      %s339 = scalar_select %p338, %s21, 1
      %s340 = smul.addr %s339, 3
      %s341 = scalar_lea.vmem %s7, %s340
      %p342 = pneg %p230
      %p343 = pneg %p227
      %p344 = scmp.lt.s32.totalorder %s21, 1
      %s345 = scalar_select %p344, %s21, 1
      %s346 = smul.addr %s345, 3
      %s347 = smul.addr %s346, 2
      %s348 = scalar_lea.vmem %s8, %s347
      %p349 = pneg %p256
      %p350 = pneg %p253
      %p351 = scmp.lt.s32.totalorder %s21, 1
      %s352 = scalar_select %p351, %s21, 1
      %s353 = smul.addr %s352, 3
      %s354 = smul.addr %s353, 4
      %s355 = scalar_lea.vmem %s9, %s354
      %p356 = scmp.lt.s32.totalorder %s21, 1
      %s357 = scalar_select %p356, %s21, 1
      %s358 = smul.addr %s357, 96
      %s359 = smul.addr %s358, 4
      %s360 = scalar_lea.vmem %s0, %s359
      %p361 = scmp.lt.s32.totalorder %s21, 1
      %s362 = scalar_select %p361, %s21, 1
      %s363 = smul.addr %s362, 3
      %s364 = scalar_lea.vmem %s1, %s363
      %p365 = scmp.lt.s32.totalorder %s21, 1
      %s366 = scalar_select %p365, %s21, 1
      %s367 = smul.addr %s366, 3
      %s368 = scalar_lea.vmem %s6, %s367
      %p369 = scmp.lt.s32.totalorder %s21, 1
      %s370 = scalar_select %p369, %s21, 1
      %s371 = smul.addr %s370, 3
      %s372 = scalar_lea.vmem %s7, %s371
      %p373 = scmp.lt.s32.totalorder %s21, 1
      %s374 = scalar_select %p373, %s21, 1
      %s375 = smul.addr %s374, 3
      %s376 = smul.addr %s375, 2
      %s377 = scalar_lea.vmem %s8, %s376
      %p378 = scmp.lt.s32.totalorder %s21, 1
      %s379 = scalar_select %p378, %s21, 1
      %s380 = smul.addr %s379, 3
      %s381 = smul.addr %s380, 4
      %s382 = scalar_lea.vmem %s9, %s381
      %v384 = vld [vmem:[%s2] sm:$0xff]
      %v385 = vld [vmem:[%s2 + $0x8] sm:$0xff]
      %v386 = vld [vmem:[%s2 + $0x10] sm:$0xff]
      %v387 = vld [vmem:[%s2 + $0x18] sm:$0xff]
      %v388 = vld [vmem:[%s2 + $0x20] sm:$0xff]
      %v389 = vld [vmem:[%s2 + $0x28] sm:$0xff]
      %v390 = vld [vmem:[%s2 + $0x30] sm:$0xff]
      %v391 = vld [vmem:[%s2 + $0x38] sm:$0xff]
      %v392 = vld [vmem:[%s2 + $0x40] sm:$0xff]
      %v393 = vld [vmem:[%s2 + $0x48] sm:$0xff]
      %v394 = vld [vmem:[%s2 + $0x50] sm:$0xff]
      %v395 = vld [vmem:[%s2 + $0x58] sm:$0xff]
      %v396 = vld [vmem:[%s2 + $0x60] sm:$0xff]
      %v397 = vld [vmem:[%s2 + $0x68] sm:$0xff]
      %v398 = vld [vmem:[%s2 + $0x70] sm:$0xff]
      %v399 = vld [vmem:[%s2 + $0x78] sm:$0xff]
      %v400 = vld [vmem:[%s360] sm:$0xff]
      %v401 = vld [vmem:[%s360 + $0x8] sm:$0xf]
      %v402 = vld [vmem:[%s360 + $0xc] sm:$0xff]
      %v403 = vld [vmem:[%s360 + $0x14] sm:$0xf]
      %v404 = vld [vmem:[%s360 + $0x18] sm:$0xff]
      %v405 = vld [vmem:[%s360 + $0x20] sm:$0xf]
      %v406 = vld [vmem:[%s360 + $0x24] sm:$0xff]
      %v407 = vld [vmem:[%s360 + $0x2c] sm:$0xf]
      %v408 = vld [vmem:[%s360 + $0x30] sm:$0xff]
      %v409 = vld [vmem:[%s360 + $0x38] sm:$0xf]
      %v410 = vld [vmem:[%s360 + $0x3c] sm:$0xff]
      %v411 = vld [vmem:[%s360 + $0x44] sm:$0xf]
      %v412 = vld [vmem:[%s360 + $0x48] sm:$0xff]
      %v413 = vld [vmem:[%s360 + $0x50] sm:$0xf]
      %v414 = vld [vmem:[%s360 + $0x54] sm:$0xff]
      %v415 = vld [vmem:[%s360 + $0x5c] sm:$0xf]
      %v416 = vld [vmem:[%s360 + $0x60] sm:$0xff]
      %v417 = vld [vmem:[%s360 + $0x68] sm:$0xf]
      %v418 = vld [vmem:[%s360 + $0x6c] sm:$0xff]
      %v419 = vld [vmem:[%s360 + $0x74] sm:$0xf]
      %v420 = vld [vmem:[%s360 + $0x78] sm:$0xff]
      %v421 = vld [vmem:[%s360 + $0x80] sm:$0xf]
      %v422 = vld [vmem:[%s360 + $0x84] sm:$0xff]
      %v423 = vld [vmem:[%s360 + $0x8c] sm:$0xf]
      %v424 = vld [vmem:[%s360 + $0x90] sm:$0xff]
      %v425 = vld [vmem:[%s360 + $0x98] sm:$0xf]
      %v426 = vld [vmem:[%s360 + $0x9c] sm:$0xff]
      %v427 = vld [vmem:[%s360 + $0xa4] sm:$0xf]
      %v428 = vld [vmem:[%s360 + $0xa8] sm:$0xff]
      %v429 = vld [vmem:[%s360 + $0xb0] sm:$0xf]
      %v430 = vld [vmem:[%s360 + $0xb4] sm:$0xff]
      %v431 = vld [vmem:[%s360 + $0xbc] sm:$0xf]
      %v432 = vld [vmem:[%s360 + $0xc0] sm:$0xff]
      %v433 = vld [vmem:[%s360 + $0xc8] sm:$0xf]
      %v434 = vld [vmem:[%s360 + $0xcc] sm:$0xff]
      %v435 = vld [vmem:[%s360 + $0xd4] sm:$0xf]
      %v436 = vld [vmem:[%s360 + $0xd8] sm:$0xff]
      %v437 = vld [vmem:[%s360 + $0xe0] sm:$0xf]
      %v438 = vld [vmem:[%s360 + $0xe4] sm:$0xff]
      %v439 = vld [vmem:[%s360 + $0xec] sm:$0xf]
      %v440 = vld [vmem:[%s360 + $0xf0] sm:$0xff]
      %v441 = vld [vmem:[%s360 + $0xf8] sm:$0xf]
      %v442 = vld [vmem:[%s360 + $0xfc] sm:$0xff]
      %v443 = vld [vmem:[%s360 + $0x104] sm:$0xf]
      %v444 = vld [vmem:[%s360 + $0x108] sm:$0xff]
      %v445 = vld [vmem:[%s360 + $0x110] sm:$0xf]
      %v446 = vld [vmem:[%s360 + $0x114] sm:$0xff]
      %v447 = vld [vmem:[%s360 + $0x11c] sm:$0xf]
      %v448 = vld [vmem:[%s360 + $0x120] sm:$0xff]
      %v449 = vld [vmem:[%s360 + $0x128] sm:$0xf]
      %v450 = vld [vmem:[%s360 + $0x12c] sm:$0xff]
      %v451 = vld [vmem:[%s360 + $0x134] sm:$0xf]
      %v452 = vld [vmem:[%s360 + $0x138] sm:$0xff]
      %v453 = vld [vmem:[%s360 + $0x140] sm:$0xf]
      %v454 = vld [vmem:[%s360 + $0x144] sm:$0xff]
      %v455 = vld [vmem:[%s360 + $0x14c] sm:$0xf]
      %v456 = vld [vmem:[%s360 + $0x150] sm:$0xff]
      %v457 = vld [vmem:[%s360 + $0x158] sm:$0xf]
      %v458 = vld [vmem:[%s360 + $0x15c] sm:$0xff]
      %v459 = vld [vmem:[%s360 + $0x164] sm:$0xf]
      %v460 = vld [vmem:[%s360 + $0x168] sm:$0xff]
      %v461 = vld [vmem:[%s360 + $0x170] sm:$0xf]
      %v462 = vld [vmem:[%s360 + $0x174] sm:$0xff]
      %v463 = vld [vmem:[%s360 + $0x17c] sm:$0xf]
      %v464 = vld [vmem:[%s5] sm:$0xff]
      %v465 = vld [vmem:[%s5 + $0x8] sm:$0xff]
      %v466 = vld [vmem:[%s5 + $0x10] sm:$0xff]
      %v467 = vld [vmem:[%s5 + $0x18] sm:$0xff]
      %v468 = vld [vmem:[%s5 + $0x20] sm:$0xff]
      %v469 = vld [vmem:[%s5 + $0x28] sm:$0xff]
      %v470 = vld [vmem:[%s5 + $0x30] sm:$0xff]
      %v471 = vld [vmem:[%s5 + $0x38] sm:$0xff]
      %v472 = vld [vmem:[%s5 + $0x40] sm:$0xff]
      %v473 = vld [vmem:[%s5 + $0x48] sm:$0xff]
      %v474 = vld [vmem:[%s5 + $0x50] sm:$0xff]
      %v475 = vld [vmem:[%s5 + $0x58] sm:$0xff]
      %v476 = vld [vmem:[%s5 + $0x60] sm:$0xff]
      %v477 = vld [vmem:[%s5 + $0x68] sm:$0xff]
      %v478 = vld [vmem:[%s5 + $0x70] sm:$0xff]
      %v479 = vld [vmem:[%s5 + $0x78] sm:$0xff]
      %481 = vset.pattern.permute.xlu0 0
      %482 = vperm.xlu0 %481, %v464
      %v483 = vpop.permute.xlu0 %482
      %486 = vset.pattern.permute.xlu0 0
      %487 = vperm.xlu0 %486, %v465
      %v488 = vpop.permute.xlu0 %487
      %491 = vset.pattern.permute.xlu0 0
      %492 = vperm.xlu0 %491, %v466
      %v493 = vpop.permute.xlu0 %492
      %496 = vset.pattern.permute.xlu0 0
      %497 = vperm.xlu0 %496, %v467
      %v498 = vpop.permute.xlu0 %497
      %501 = vset.pattern.permute.xlu0 0
      %502 = vperm.xlu0 %501, %v468
      %v503 = vpop.permute.xlu0 %502
      %506 = vset.pattern.permute.xlu0 0
      %507 = vperm.xlu0 %506, %v469
      %v508 = vpop.permute.xlu0 %507
      %511 = vset.pattern.permute.xlu0 0
      %512 = vperm.xlu0 %511, %v470
      %v513 = vpop.permute.xlu0 %512
      %516 = vset.pattern.permute.xlu0 0
      %517 = vperm.xlu0 %516, %v471
      %v518 = vpop.permute.xlu0 %517
      %521 = vset.pattern.permute.xlu0 0
      %522 = vperm.xlu0 %521, %v472
      %v523 = vpop.permute.xlu0 %522
      %526 = vset.pattern.permute.xlu0 0
      %527 = vperm.xlu0 %526, %v473
      %v528 = vpop.permute.xlu0 %527
      %531 = vset.pattern.permute.xlu0 0
      %532 = vperm.xlu0 %531, %v474
      %v533 = vpop.permute.xlu0 %532
      %536 = vset.pattern.permute.xlu0 0
      %537 = vperm.xlu0 %536, %v475
      %v538 = vpop.permute.xlu0 %537
      %541 = vset.pattern.permute.xlu0 0
      %542 = vperm.xlu0 %541, %v476
      %v543 = vpop.permute.xlu0 %542
      %546 = vset.pattern.permute.xlu0 0
      %547 = vperm.xlu0 %546, %v477
      %v548 = vpop.permute.xlu0 %547
      %551 = vset.pattern.permute.xlu0 0
      %552 = vperm.xlu0 %551, %v478
      %v553 = vpop.permute.xlu0 %552
      %556 = vset.pattern.permute.xlu0 0
      %557 = vperm.xlu0 %556, %v479
      %v558 = vpop.permute.xlu0 %557
      %v576 = vunpack.c.l.b16 %v384
      %v577 = vunpack.c.h.b16 %v384
      %v578 = vunpack.c.l.b16 %v385
      %v579 = vunpack.c.h.b16 %v385
      %v580 = vunpack.c.l.b16 %v386
      %v581 = vunpack.c.h.b16 %v386
      %v582 = vunpack.c.l.b16 %v387
      %v583 = vunpack.c.h.b16 %v387
      %v584 = vunpack.c.l.b16 %v388
      %v585 = vunpack.c.h.b16 %v388
      %v586 = vunpack.c.l.b16 %v389
      %v587 = vunpack.c.h.b16 %v389
      %v588 = vunpack.c.l.b16 %v390
      %v589 = vunpack.c.h.b16 %v390
      %v590 = vunpack.c.l.b16 %v391
      %v591 = vunpack.c.h.b16 %v391
      %v592 = vunpack.c.l.b16 %v392
      %v593 = vunpack.c.h.b16 %v392
      %v594 = vunpack.c.l.b16 %v393
      %v595 = vunpack.c.h.b16 %v393
      %v596 = vunpack.c.l.b16 %v394
      %v597 = vunpack.c.h.b16 %v394
      %v598 = vunpack.c.l.b16 %v395
      %v599 = vunpack.c.h.b16 %v395
      %v600 = vunpack.c.l.b16 %v396
      %v601 = vunpack.c.h.b16 %v396
      %v602 = vunpack.c.l.b16 %v397
      %v603 = vunpack.c.h.b16 %v397
      %v604 = vunpack.c.l.b16 %v398
      %v605 = vunpack.c.h.b16 %v398
      %v606 = vunpack.c.l.b16 %v399
      %v607 = vunpack.c.h.b16 %v399
      %v608 = vpack.c.b16 %v578, %v576
      %v609 = vpack.c.b16 %v579, %v577
      %v610 = vpack.c.b16 %v582, %v580
      %v611 = vpack.c.b16 %v583, %v581
      %v612 = vpack.c.b16 %v586, %v584
      %v613 = vpack.c.b16 %v587, %v585
      %v614 = vpack.c.b16 %v590, %v588
      %v615 = vpack.c.b16 %v591, %v589
      %v616 = vpack.c.b16 %v594, %v592
      %v617 = vpack.c.b16 %v595, %v593
      %v618 = vpack.c.b16 %v598, %v596
      %v619 = vpack.c.b16 %v599, %v597
      %v620 = vpack.c.b16 %v602, %v600
      %v621 = vpack.c.b16 %v603, %v601
      %v622 = vpack.c.b16 %v606, %v604
      %v623 = vpack.c.b16 %v607, %v605
      %v704 = vunpack.c.l.b16 %v400
      %v705 = vunpack.c.h.b16 %v400
      %v706 = vunpack.c.l.b16 %v401
      %v707 = vunpack.c.l.b16 %v402
      %v708 = vunpack.c.h.b16 %v402
      %v709 = vunpack.c.l.b16 %v403
      %v710 = vunpack.c.l.b16 %v404
      %v711 = vunpack.c.h.b16 %v404
      %v712 = vunpack.c.l.b16 %v405
      %v713 = vunpack.c.l.b16 %v406
      %v714 = vunpack.c.h.b16 %v406
      %v715 = vunpack.c.l.b16 %v407
      %v716 = vunpack.c.l.b16 %v408
      %v717 = vunpack.c.h.b16 %v408
      %v718 = vunpack.c.l.b16 %v409
      %v719 = vunpack.c.l.b16 %v410
      %v720 = vunpack.c.h.b16 %v410
      %v721 = vunpack.c.l.b16 %v411
      %v722 = vunpack.c.l.b16 %v412
      %v723 = vunpack.c.h.b16 %v412
      %v724 = vunpack.c.l.b16 %v413
      %v725 = vunpack.c.l.b16 %v414
      %v726 = vunpack.c.h.b16 %v414
      %v727 = vunpack.c.l.b16 %v415
      %v728 = vunpack.c.l.b16 %v416
      %v729 = vunpack.c.h.b16 %v416
      %v730 = vunpack.c.l.b16 %v417
      %v731 = vunpack.c.l.b16 %v418
      %v732 = vunpack.c.h.b16 %v418
      %v733 = vunpack.c.l.b16 %v419
      %v734 = vunpack.c.l.b16 %v420
      %v735 = vunpack.c.h.b16 %v420
      %v736 = vunpack.c.l.b16 %v421
      %v737 = vunpack.c.l.b16 %v422
      %v738 = vunpack.c.h.b16 %v422
      %v739 = vunpack.c.l.b16 %v423
      %v740 = vunpack.c.l.b16 %v424
      %v741 = vunpack.c.h.b16 %v424
      %v742 = vunpack.c.l.b16 %v425
      %v743 = vunpack.c.l.b16 %v426
      %v744 = vunpack.c.h.b16 %v426
      %v745 = vunpack.c.l.b16 %v427
      %v746 = vunpack.c.l.b16 %v428
      %v747 = vunpack.c.h.b16 %v428
      %v748 = vunpack.c.l.b16 %v429
      %v749 = vunpack.c.l.b16 %v430
      %v750 = vunpack.c.h.b16 %v430
      %v751 = vunpack.c.l.b16 %v431
      %v752 = vunpack.c.l.b16 %v432
      %v753 = vunpack.c.h.b16 %v432
      %v754 = vunpack.c.l.b16 %v433
      %v755 = vunpack.c.l.b16 %v434
      %v756 = vunpack.c.h.b16 %v434
      %v757 = vunpack.c.l.b16 %v435
      %v758 = vunpack.c.l.b16 %v436
      %v759 = vunpack.c.h.b16 %v436
      %v760 = vunpack.c.l.b16 %v437
      %v761 = vunpack.c.l.b16 %v438
      %v762 = vunpack.c.h.b16 %v438
      %v763 = vunpack.c.l.b16 %v439
      %v764 = vunpack.c.l.b16 %v440
      %v765 = vunpack.c.h.b16 %v440
      %v766 = vunpack.c.l.b16 %v441
      %v767 = vunpack.c.l.b16 %v442
      %v768 = vunpack.c.h.b16 %v442
      %v769 = vunpack.c.l.b16 %v443
      %v770 = vunpack.c.l.b16 %v444
      %v771 = vunpack.c.h.b16 %v444
      %v772 = vunpack.c.l.b16 %v445
      %v773 = vunpack.c.l.b16 %v446
      %v774 = vunpack.c.h.b16 %v446
      %v775 = vunpack.c.l.b16 %v447
      %v776 = vunpack.c.l.b16 %v448
      %v777 = vunpack.c.h.b16 %v448
      %v778 = vunpack.c.l.b16 %v449
      %v779 = vunpack.c.l.b16 %v450
      %v780 = vunpack.c.h.b16 %v450
      %v781 = vunpack.c.l.b16 %v451
      %v782 = vunpack.c.l.b16 %v452
      %v783 = vunpack.c.h.b16 %v452
      %v784 = vunpack.c.l.b16 %v453
      %v785 = vunpack.c.l.b16 %v454
      %v786 = vunpack.c.h.b16 %v454
      %v787 = vunpack.c.l.b16 %v455
      %v788 = vunpack.c.l.b16 %v456
      %v789 = vunpack.c.h.b16 %v456
      %v790 = vunpack.c.l.b16 %v457
      %v791 = vunpack.c.l.b16 %v458
      %v792 = vunpack.c.h.b16 %v458
      %v793 = vunpack.c.l.b16 %v459
      %v794 = vunpack.c.l.b16 %v460
      %v795 = vunpack.c.h.b16 %v460
      %v796 = vunpack.c.l.b16 %v461
      %v797 = vunpack.c.l.b16 %v462
      %v798 = vunpack.c.h.b16 %v462
      %v799 = vunpack.c.l.b16 %v463
      %v800 = vpack.c.b16 %v707, %v704
      %v801 = vpack.c.b16 %v708, %v705
      %v802 = vpack.c.b16 %v709, %v706
      %v803 = vpack.c.b16 %v713, %v710
      %v804 = vpack.c.b16 %v714, %v711
      %v805 = vpack.c.b16 %v715, %v712
      %v806 = vpack.c.b16 %v719, %v716
      %v807 = vpack.c.b16 %v720, %v717
      %v808 = vpack.c.b16 %v721, %v718
      %v809 = vpack.c.b16 %v725, %v722
      %v810 = vpack.c.b16 %v726, %v723
      %v811 = vpack.c.b16 %v727, %v724
      %v812 = vpack.c.b16 %v731, %v728
      %v813 = vpack.c.b16 %v732, %v729
      %v814 = vpack.c.b16 %v733, %v730
      %v815 = vpack.c.b16 %v737, %v734
      %v816 = vpack.c.b16 %v738, %v735
      %v817 = vpack.c.b16 %v739, %v736
      %v818 = vpack.c.b16 %v743, %v740
      %v819 = vpack.c.b16 %v744, %v741
      %v820 = vpack.c.b16 %v745, %v742
      %v821 = vpack.c.b16 %v749, %v746
      %v822 = vpack.c.b16 %v750, %v747
      %v823 = vpack.c.b16 %v751, %v748
      %v824 = vpack.c.b16 %v755, %v752
      %v825 = vpack.c.b16 %v756, %v753
      %v826 = vpack.c.b16 %v757, %v754
      %v827 = vpack.c.b16 %v761, %v758
      %v828 = vpack.c.b16 %v762, %v759
      %v829 = vpack.c.b16 %v763, %v760
      %v830 = vpack.c.b16 %v767, %v764
      %v831 = vpack.c.b16 %v768, %v765
      %v832 = vpack.c.b16 %v769, %v766
      %v833 = vpack.c.b16 %v773, %v770
      %v834 = vpack.c.b16 %v774, %v771
      %v835 = vpack.c.b16 %v775, %v772
      %v836 = vpack.c.b16 %v779, %v776
      %v837 = vpack.c.b16 %v780, %v777
      %v838 = vpack.c.b16 %v781, %v778
      %v839 = vpack.c.b16 %v785, %v782
      %v840 = vpack.c.b16 %v786, %v783
      %v841 = vpack.c.b16 %v787, %v784
      %v842 = vpack.c.b16 %v791, %v788
      %v843 = vpack.c.b16 %v792, %v789
      %v844 = vpack.c.b16 %v793, %v790
      %v845 = vpack.c.b16 %v797, %v794
      %v846 = vpack.c.b16 %v798, %v795
      %v847 = vpack.c.b16 %v799, %v796
      %896 = vmatprep.subr.bf16.mxu0 %v801
      %897 = vmatpush1.bf16.msra.mxu0 %v800
      %898 = vmatprep.subr.bf16.mxu0 %v804
      %899 = vmatpush1.bf16.msra.mxu0 %v803
      %900 = vmatprep.subr.bf16.mxu0 %v807
      %901 = vmatpush1.bf16.msra.mxu0 %v806
      %902 = vmatprep.subr.bf16.mxu0 %v810
      %903 = vmatpush1.bf16.msra.mxu0 %v809
      %904 = vmatprep.subr.bf16.mxu0 %v813
      %905 = vmatpush1.bf16.msra.mxu0 %v812
      %906 = vmatprep.subr.bf16.mxu0 %v816
      %907 = vmatpush1.bf16.msra.mxu0 %v815
      %908 = vmatprep.subr.bf16.mxu0 %v819
      %909 = vmatpush1.bf16.msra.mxu0 %v818
      %910 = vmatprep.subr.bf16.mxu0 %v822
      %911 = vmatpush1.bf16.msra.mxu0 %v821
      %912 = vmatprep.subr.bf16.mxu0 %v825
      %913 = vmatpush1.bf16.msra.mxu0 %v824
      %914 = vmatprep.subr.bf16.mxu0 %v828
      %915 = vmatpush1.bf16.msra.mxu0 %v827
      %916 = vmatprep.subr.bf16.mxu0 %v831
      %917 = vmatpush1.bf16.msra.mxu0 %v830
      %918 = vmatprep.subr.bf16.mxu0 %v834
      %919 = vmatpush1.bf16.msra.mxu0 %v833
      %920 = vmatprep.subr.bf16.mxu0 %v837
      %921 = vmatpush1.bf16.msra.mxu0 %v836
      %922 = vmatprep.subr.bf16.mxu0 %v840
      %923 = vmatpush1.bf16.msra.mxu0 %v839
      %924 = vmatprep.subr.bf16.mxu0 %v843
      %925 = vmatpush1.bf16.msra.mxu0 %v842
      %926 = vmatprep.subr.bf16.mxu0 %v846
      %927 = vmatpush1.bf16.msra.mxu0 %v845
      %928 = vmatprep.mubr.bf16.mxu0 %v609
      %929 = vmatmul.mubr.bf16.gmra.mrb[0].mxu0 %v608
      %v930 = vpop.f32.mrb[0].mxu0
      %v931 = vadd.f32 %v483, %v930
      %v932 = vpop.f32.mrb[0].mxu0
      %v933 = vadd.f32 %v483, %v932
      %v934 = vpop.f32.mrb[0].mxu0
      %v935 = vadd.f32 %v488, %v934
      %v936 = vpop.f32.mrb[0].mxu0
      %v937 = vadd.f32 %v488, %v936
      %938 = vmatprep.mubr.bf16.mxu0 %v611
      %939 = vmatmul.mubr.bf16.gmra.mrb[0].mxu0 %v610
      %v940 = vpop.f32.mrb[0].mxu0
      %v941 = vadd.f32 %v493, %v940
      %v942 = vpop.f32.mrb[0].mxu0
      %v943 = vadd.f32 %v493, %v942
      %v944 = vpop.f32.mrb[0].mxu0
      %v945 = vadd.f32 %v498, %v944
      %v946 = vpop.f32.mrb[0].mxu0
      %v947 = vadd.f32 %v498, %v946
      %948 = vmatprep.mubr.bf16.mxu0 %v613
      %949 = vmatmul.mubr.bf16.gmra.mrb[0].mxu0 %v612
      %v950 = vpop.f32.mrb[0].mxu0
      %v951 = vadd.f32 %v503, %v950
      %v952 = vpop.f32.mrb[0].mxu0
      %v953 = vadd.f32 %v503, %v952
      %v954 = vpop.f32.mrb[0].mxu0
      %v955 = vadd.f32 %v508, %v954
      %v956 = vpop.f32.mrb[0].mxu0
      %v957 = vadd.f32 %v508, %v956
      %958 = vmatprep.mubr.bf16.mxu0 %v615
      %959 = vmatmul.mubr.bf16.gmra.mrb[0].mxu0 %v614
      %v960 = vpop.f32.mrb[0].mxu0
      %v961 = vadd.f32 %v513, %v960
      %v962 = vpop.f32.mrb[0].mxu0
      %v963 = vadd.f32 %v513, %v962
      %v964 = vpop.f32.mrb[0].mxu0
      %v965 = vadd.f32 %v518, %v964
      %v966 = vpop.f32.mrb[0].mxu0
      %v967 = vadd.f32 %v518, %v966
      %968 = vmatprep.mubr.bf16.mxu0 %v617
      %969 = vmatmul.mubr.bf16.gmra.mrb[0].mxu0 %v616
      %v970 = vpop.f32.mrb[0].mxu0
      %v971 = vadd.f32 %v523, %v970
      %v972 = vpop.f32.mrb[0].mxu0
      %v973 = vadd.f32 %v523, %v972
      %v974 = vpop.f32.mrb[0].mxu0
      %v975 = vadd.f32 %v528, %v974
      %v976 = vpop.f32.mrb[0].mxu0
      %v977 = vadd.f32 %v528, %v976
      %978 = vmatprep.mubr.bf16.mxu0 %v619
      %979 = vmatmul.mubr.bf16.gmra.mrb[0].mxu0 %v618
      %v980 = vpop.f32.mrb[0].mxu0
      %v981 = vadd.f32 %v533, %v980
      %v982 = vpop.f32.mrb[0].mxu0
      %v983 = vadd.f32 %v533, %v982
      %v984 = vpop.f32.mrb[0].mxu0
      %v985 = vadd.f32 %v538, %v984
      %v986 = vpop.f32.mrb[0].mxu0
      %v987 = vadd.f32 %v538, %v986
      %988 = vmatprep.mubr.bf16.mxu0 %v621
      %989 = vmatmul.mubr.bf16.gmra.mrb[0].mxu0 %v620
      %v990 = vpop.f32.mrb[0].mxu0
      %v991 = vadd.f32 %v543, %v990
      %v992 = vpop.f32.mrb[0].mxu0
      %v993 = vadd.f32 %v543, %v992
      %v994 = vpop.f32.mrb[0].mxu0
      %v995 = vadd.f32 %v548, %v994
      %v996 = vpop.f32.mrb[0].mxu0
      %v997 = vadd.f32 %v548, %v996
      %998 = vmatprep.mubr.bf16.mxu0 %v623
      %999 = vmatmul.mubr.bf16.gmra.mrb[0].mxu0 %v622
      %v1000 = vpop.f32.mrb[0].mxu0
      %v1001 = vadd.f32 %v553, %v1000
      %v1002 = vpop.f32.mrb[0].mxu0
      %v1003 = vadd.f32 %v553, %v1002
      %v1004 = vpop.f32.mrb[0].mxu0
      %v1005 = vadd.f32 %v558, %v1004
      %v1006 = vpop.f32.mrb[0].mxu0
      %v1007 = vadd.f32 %v558, %v1006
      %1008 = vdwg.mxu0
      %1009 = vmatprep.subr.bf16.mxu0 0
      %1010 = vmatpush1.bf16.msra.mxu0 %v802
      %1011 = vmatprep.subr.bf16.mxu0 0
      %1012 = vmatpush1.bf16.msra.mxu0 %v805
      %1013 = vmatprep.subr.bf16.mxu0 0
      %1014 = vmatpush1.bf16.msra.mxu0 %v808
      %1015 = vmatprep.subr.bf16.mxu0 0
      %1016 = vmatpush1.bf16.msra.mxu0 %v811
      %1017 = vmatprep.subr.bf16.mxu0 0
      %1018 = vmatpush1.bf16.msra.mxu0 %v814
      %1019 = vmatprep.subr.bf16.mxu0 0
      %1020 = vmatpush1.bf16.msra.mxu0 %v817
      %1021 = vmatprep.subr.bf16.mxu0 0
      %1022 = vmatpush1.bf16.msra.mxu0 %v820
      %1023 = vmatprep.subr.bf16.mxu0 0
      %1024 = vmatpush1.bf16.msra.mxu0 %v823
      %1025 = vmatprep.subr.bf16.mxu0 0
      %1026 = vmatpush1.bf16.msra.mxu0 %v826
      %1027 = vmatprep.subr.bf16.mxu0 0
      %1028 = vmatpush1.bf16.msra.mxu0 %v829
      %1029 = vmatprep.subr.bf16.mxu0 0
      %1030 = vmatpush1.bf16.msra.mxu0 %v832
      %1031 = vmatprep.subr.bf16.mxu0 0
      %1032 = vmatpush1.bf16.msra.mxu0 %v835
      %1033 = vmatprep.subr.bf16.mxu0 0
      %1034 = vmatpush1.bf16.msra.mxu0 %v838
      %1035 = vmatprep.subr.bf16.mxu0 0
      %1036 = vmatpush1.bf16.msra.mxu0 %v841
      %1037 = vmatprep.subr.bf16.mxu0 0
      %1038 = vmatpush1.bf16.msra.mxu0 %v844
      %1039 = vmatprep.subr.bf16.mxu0 0
      %1040 = vmatpush1.bf16.msra.mxu0 %v847
      %1041 = vmatprep.mubr.bf16.mxu0 %v609
      %1042 = vmatmul.mubr.bf16.gmra.mrb[0].mxu0 %v608
      %v1043 = vpop.f32.mrb[0].mxu0
      %v1044 = vadd.f32 %v483, %v1043
      %v1045 = vpop.f32.mrb[0].mxu0
      %v1046 = vpop.f32.mrb[0].mxu0
      %v1047 = vadd.f32 %v488, %v1046
      %v1048 = vpop.f32.mrb[0].mxu0
      %1049 = vmatprep.mubr.bf16.mxu0 %v611
      %1050 = vmatmul.mubr.bf16.gmra.mrb[0].mxu0 %v610
      %v1051 = vpop.f32.mrb[0].mxu0
      %v1052 = vadd.f32 %v493, %v1051
      %v1053 = vpop.f32.mrb[0].mxu0
      %v1054 = vpop.f32.mrb[0].mxu0
      %v1055 = vadd.f32 %v498, %v1054
      %v1056 = vpop.f32.mrb[0].mxu0
      %1057 = vmatprep.mubr.bf16.mxu0 %v613
      %1058 = vmatmul.mubr.bf16.gmra.mrb[0].mxu0 %v612
      %v1059 = vpop.f32.mrb[0].mxu0
      %v1060 = vadd.f32 %v503, %v1059
      %v1061 = vpop.f32.mrb[0].mxu0
      %v1062 = vpop.f32.mrb[0].mxu0
      %v1063 = vadd.f32 %v508, %v1062
      %v1064 = vpop.f32.mrb[0].mxu0
      %1065 = vmatprep.mubr.bf16.mxu0 %v615
      %1066 = vmatmul.mubr.bf16.gmra.mrb[0].mxu0 %v614
      %v1067 = vpop.f32.mrb[0].mxu0
      %v1068 = vadd.f32 %v513, %v1067
      %v1069 = vpop.f32.mrb[0].mxu0
      %v1070 = vpop.f32.mrb[0].mxu0
      %v1071 = vadd.f32 %v518, %v1070
      %v1072 = vpop.f32.mrb[0].mxu0
      %1073 = vmatprep.mubr.bf16.mxu0 %v617
      %1074 = vmatmul.mubr.bf16.gmra.mrb[0].mxu0 %v616
      %v1075 = vpop.f32.mrb[0].mxu0
      %v1076 = vadd.f32 %v523, %v1075
      %v1077 = vpop.f32.mrb[0].mxu0
      %v1078 = vpop.f32.mrb[0].mxu0
      %v1079 = vadd.f32 %v528, %v1078
      %v1080 = vpop.f32.mrb[0].mxu0
      %1081 = vmatprep.mubr.bf16.mxu0 %v619
      %1082 = vmatmul.mubr.bf16.gmra.mrb[0].mxu0 %v618
      %v1083 = vpop.f32.mrb[0].mxu0
      %v1084 = vadd.f32 %v533, %v1083
      %v1085 = vpop.f32.mrb[0].mxu0
      %v1086 = vpop.f32.mrb[0].mxu0
      %v1087 = vadd.f32 %v538, %v1086
      %v1088 = vpop.f32.mrb[0].mxu0
      %1089 = vmatprep.mubr.bf16.mxu0 %v621
      %1090 = vmatmul.mubr.bf16.gmra.mrb[0].mxu0 %v620
      %v1091 = vpop.f32.mrb[0].mxu0
      %v1092 = vadd.f32 %v543, %v1091
      %v1093 = vpop.f32.mrb[0].mxu0
      %v1094 = vpop.f32.mrb[0].mxu0
      %v1095 = vadd.f32 %v548, %v1094
      %v1096 = vpop.f32.mrb[0].mxu0
      %1097 = vmatprep.mubr.bf16.mxu0 %v623
      %1098 = vmatmul.mubr.bf16.gmra.mrb[0].mxu0 %v622
      %v1099 = vpop.f32.mrb[0].mxu0
      %v1100 = vadd.f32 %v553, %v1099
      %v1101 = vpop.f32.mrb[0].mxu0
      %v1102 = vpop.f32.mrb[0].mxu0
      %v1103 = vadd.f32 %v558, %v1102
      %v1104 = vpop.f32.mrb[0].mxu0
      %1105 = vdwg.mxu0
      %v1106 = vmul.f32 %v931, 0.01
      %v1107 = vmul.f32 %v933, 0.01
      %v1108 = vmul.f32 %v1044, 0.01
      %v1109 = vmul.f32 %v935, 0.01
      %v1110 = vmul.f32 %v937, 0.01
      %v1111 = vmul.f32 %v1047, 0.01
      %v1112 = vmul.f32 %v941, 0.01
      %v1113 = vmul.f32 %v943, 0.01
      %v1114 = vmul.f32 %v1052, 0.01
      %v1115 = vmul.f32 %v945, 0.01
      %v1116 = vmul.f32 %v947, 0.01
      %v1117 = vmul.f32 %v1055, 0.01
      %v1118 = vmul.f32 %v951, 0.01
      %v1119 = vmul.f32 %v953, 0.01
      %v1120 = vmul.f32 %v1060, 0.01
      %v1121 = vmul.f32 %v955, 0.01
      %v1122 = vmul.f32 %v957, 0.01
      %v1123 = vmul.f32 %v1063, 0.01
      %v1124 = vmul.f32 %v961, 0.01
      %v1125 = vmul.f32 %v963, 0.01
      %v1126 = vmul.f32 %v1068, 0.01
      %v1127 = vmul.f32 %v965, 0.01
      %v1128 = vmul.f32 %v967, 0.01
      %v1129 = vmul.f32 %v1071, 0.01
      %v1130 = vmul.f32 %v971, 0.01
      %v1131 = vmul.f32 %v973, 0.01
      %v1132 = vmul.f32 %v1076, 0.01
      %v1133 = vmul.f32 %v975, 0.01
      %v1134 = vmul.f32 %v977, 0.01
      %v1135 = vmul.f32 %v1079, 0.01
      %v1136 = vmul.f32 %v981, 0.01
      %v1137 = vmul.f32 %v983, 0.01
      %v1138 = vmul.f32 %v1084, 0.01
      %v1139 = vmul.f32 %v985, 0.01
      %v1140 = vmul.f32 %v987, 0.01
      %v1141 = vmul.f32 %v1087, 0.01
      %v1142 = vmul.f32 %v991, 0.01
      %v1143 = vmul.f32 %v993, 0.01
      %v1144 = vmul.f32 %v1092, 0.01
      %v1145 = vmul.f32 %v995, 0.01
      %v1146 = vmul.f32 %v997, 0.01
      %v1147 = vmul.f32 %v1095, 0.01
      %v1148 = vmul.f32 %v1001, 0.01
      %v1149 = vmul.f32 %v1003, 0.01
      %v1150 = vmul.f32 %v1100, 0.01
      %v1151 = vmul.f32 %v1005, 0.01
      %v1152 = vmul.f32 %v1007, 0.01
      %v1153 = vmul.f32 %v1103, 0.01
      %v1154 = vmax.f32 %v931, %v1106
      %v1155 = vmax.f32 %v933, %v1107
      %v1156 = vmax.f32 %v1044, %v1108
      %v1157 = vmax.f32 %v935, %v1109
      %v1158 = vmax.f32 %v937, %v1110
      %v1159 = vmax.f32 %v1047, %v1111
      %v1160 = vmax.f32 %v941, %v1112
      %v1161 = vmax.f32 %v943, %v1113
      %v1162 = vmax.f32 %v1052, %v1114
      %v1163 = vmax.f32 %v945, %v1115
      %v1164 = vmax.f32 %v947, %v1116
      %v1165 = vmax.f32 %v1055, %v1117
      %v1166 = vmax.f32 %v951, %v1118
      %v1167 = vmax.f32 %v953, %v1119
      %v1168 = vmax.f32 %v1060, %v1120
      %v1169 = vmax.f32 %v955, %v1121
      %v1170 = vmax.f32 %v957, %v1122
      %v1171 = vmax.f32 %v1063, %v1123
      %v1172 = vmax.f32 %v961, %v1124
      %v1173 = vmax.f32 %v963, %v1125
      %v1174 = vmax.f32 %v1068, %v1126
      %v1175 = vmax.f32 %v965, %v1127
      %v1176 = vmax.f32 %v967, %v1128
      %v1177 = vmax.f32 %v1071, %v1129
      %v1178 = vmax.f32 %v971, %v1130
      %v1179 = vmax.f32 %v973, %v1131
      %v1180 = vmax.f32 %v1076, %v1132
      %v1181 = vmax.f32 %v975, %v1133
      %v1182 = vmax.f32 %v977, %v1134
      %v1183 = vmax.f32 %v1079, %v1135
      %v1184 = vmax.f32 %v981, %v1136
      %v1185 = vmax.f32 %v983, %v1137
      %v1186 = vmax.f32 %v1084, %v1138
      %v1187 = vmax.f32 %v985, %v1139
      %v1188 = vmax.f32 %v987, %v1140
      %v1189 = vmax.f32 %v1087, %v1141
      %v1190 = vmax.f32 %v991, %v1142
      %v1191 = vmax.f32 %v993, %v1143
      %v1192 = vmax.f32 %v1092, %v1144
      %v1193 = vmax.f32 %v995, %v1145
      %v1194 = vmax.f32 %v997, %v1146
      %v1195 = vmax.f32 %v1095, %v1147
      %v1196 = vmax.f32 %v1001, %v1148
      %v1197 = vmax.f32 %v1003, %v1149
      %v1198 = vmax.f32 %v1100, %v1150
      %v1199 = vmax.f32 %v1005, %v1151
      %v1200 = vmax.f32 %v1007, %v1152
      %v1201 = vmax.f32 %v1103, %v1153
      %v1202 = vpack.c.bf16 %v1157, %v1154
      %v1203 = vpack.c.bf16 %v1158, %v1155
      %v1204 = vpack.c.bf16 %v1159, %v1156
      %v1205 = vpack.c.bf16 %v1163, %v1160
      %v1206 = vpack.c.bf16 %v1164, %v1161
      %v1207 = vpack.c.bf16 %v1165, %v1162
      %v1208 = vpack.c.bf16 %v1169, %v1166
      %v1209 = vpack.c.bf16 %v1170, %v1167
      %v1210 = vpack.c.bf16 %v1171, %v1168
      %v1211 = vpack.c.bf16 %v1175, %v1172
      %v1212 = vpack.c.bf16 %v1176, %v1173
      %v1213 = vpack.c.bf16 %v1177, %v1174
      %v1214 = vpack.c.bf16 %v1181, %v1178
      %v1215 = vpack.c.bf16 %v1182, %v1179
      %v1216 = vpack.c.bf16 %v1183, %v1180
      %v1217 = vpack.c.bf16 %v1187, %v1184
      %v1218 = vpack.c.bf16 %v1188, %v1185
      %v1219 = vpack.c.bf16 %v1189, %v1186
      %v1220 = vpack.c.bf16 %v1193, %v1190
      %v1221 = vpack.c.bf16 %v1194, %v1191
      %v1222 = vpack.c.bf16 %v1195, %v1192
      %v1223 = vpack.c.bf16 %v1199, %v1196
      %v1224 = vpack.c.bf16 %v1200, %v1197
      %v1225 = vpack.c.bf16 %v1201, %v1198
      %v1226 = vld [vmem:[%s3] sm:$0xf]
      %v1227 = vld [vmem:[%s3 + $0x4] sm:$0xf]
      %v1228 = vld [vmem:[%s3 + $0x8] sm:$0xf]
      %v1229 = vld [vmem:[%s3 + $0xc] sm:$0xf]
      %v1230 = vld [vmem:[%s3 + $0x10] sm:$0xf]
      %v1231 = vld [vmem:[%s3 + $0x14] sm:$0xf]
      %v1232 = vld [vmem:[%s3 + $0x18] sm:$0xf]
      %v1233 = vld [vmem:[%s3 + $0x1c] sm:$0xf]
      %v1234 = vld [vmem:[%s3 + $0x20] sm:$0xf]
      %v1235 = vld [vmem:[%s3 + $0x24] sm:$0xf]
      %v1236 = vld [vmem:[%s3 + $0x28] sm:$0xf]
      %v1237 = vld [vmem:[%s3 + $0x2c] sm:$0xf]
      %v1238 = vld [vmem:[%s3 + $0x30] sm:$0xf]
      %v1239 = vld [vmem:[%s3 + $0x34] sm:$0xf]
      %v1240 = vld [vmem:[%s3 + $0x38] sm:$0xf]
      %v1241 = vld [vmem:[%s3 + $0x3c] sm:$0xf]
      %1242 = vset.pattern.permute.xlu0 1
      %1243 = vperm.xlu0 %1242, %v464
      %v1244 = vpop.permute.xlu0 %1243
      %1246 = vset.pattern.permute.xlu0 1
      %1247 = vperm.xlu0 %1246, %v465
      %v1248 = vpop.permute.xlu0 %1247
      %1250 = vset.pattern.permute.xlu0 1
      %1251 = vperm.xlu0 %1250, %v466
      %v1252 = vpop.permute.xlu0 %1251
      %1254 = vset.pattern.permute.xlu0 1
      %1255 = vperm.xlu0 %1254, %v467
      %v1256 = vpop.permute.xlu0 %1255
      %1258 = vset.pattern.permute.xlu0 1
      %1259 = vperm.xlu0 %1258, %v468
      %v1260 = vpop.permute.xlu0 %1259
      %1262 = vset.pattern.permute.xlu0 1
      %1263 = vperm.xlu0 %1262, %v469
      %v1264 = vpop.permute.xlu0 %1263
      %1266 = vset.pattern.permute.xlu0 1
      %1267 = vperm.xlu0 %1266, %v470
      %v1268 = vpop.permute.xlu0 %1267
      %1270 = vset.pattern.permute.xlu0 1
      %1271 = vperm.xlu0 %1270, %v471
      %v1272 = vpop.permute.xlu0 %1271
      %1274 = vset.pattern.permute.xlu0 1
      %1275 = vperm.xlu0 %1274, %v472
      %v1276 = vpop.permute.xlu0 %1275
      %1278 = vset.pattern.permute.xlu0 1
      %1279 = vperm.xlu0 %1278, %v473
      %v1280 = vpop.permute.xlu0 %1279
      %1282 = vset.pattern.permute.xlu0 1
      %1283 = vperm.xlu0 %1282, %v474
      %v1284 = vpop.permute.xlu0 %1283
      %1286 = vset.pattern.permute.xlu0 1
      %1287 = vperm.xlu0 %1286, %v475
      %v1288 = vpop.permute.xlu0 %1287
      %1290 = vset.pattern.permute.xlu0 1
      %1291 = vperm.xlu0 %1290, %v476
      %v1292 = vpop.permute.xlu0 %1291
      %1294 = vset.pattern.permute.xlu0 1
      %1295 = vperm.xlu0 %1294, %v477
      %v1296 = vpop.permute.xlu0 %1295
      %1298 = vset.pattern.permute.xlu0 1
      %1299 = vperm.xlu0 %1298, %v478
      %v1300 = vpop.permute.xlu0 %1299
      %1302 = vset.pattern.permute.xlu0 1
      %1303 = vperm.xlu0 %1302, %v479
      %v1304 = vpop.permute.xlu0 %1303
      %v1322 = vunpack.c.l.b16 %v1226
      %v1323 = vunpack.c.l.b16 %v1227
      %v1324 = vunpack.c.l.b16 %v1228
      %v1325 = vunpack.c.l.b16 %v1229
      %v1326 = vunpack.c.l.b16 %v1230
      %v1327 = vunpack.c.l.b16 %v1231
      %v1328 = vunpack.c.l.b16 %v1232
      %v1329 = vunpack.c.l.b16 %v1233
      %v1330 = vunpack.c.l.b16 %v1234
      %v1331 = vunpack.c.l.b16 %v1235
      %v1332 = vunpack.c.l.b16 %v1236
      %v1333 = vunpack.c.l.b16 %v1237
      %v1334 = vunpack.c.l.b16 %v1238
      %v1335 = vunpack.c.l.b16 %v1239
      %v1336 = vunpack.c.l.b16 %v1240
      %v1337 = vunpack.c.l.b16 %v1241
      %v1338 = vpack.c.b16 %v1323, %v1322
      %v1339 = vpack.c.b16 %v1325, %v1324
      %v1340 = vpack.c.b16 %v1327, %v1326
      %v1341 = vpack.c.b16 %v1329, %v1328
      %v1342 = vpack.c.b16 %v1331, %v1330
      %v1343 = vpack.c.b16 %v1333, %v1332
      %v1344 = vpack.c.b16 %v1335, %v1334
      %v1345 = vpack.c.b16 %v1337, %v1336
      %1354 = vmatprep.subr.bf16.mxu0 %v1203
      %1355 = vmatpush1.bf16.msra.mxu0 %v1202
      %1356 = vmatprep.subr.bf16.mxu0 %v1206
      %1357 = vmatpush1.bf16.msra.mxu0 %v1205
      %1358 = vmatprep.subr.bf16.mxu0 %v1209
      %1359 = vmatpush1.bf16.msra.mxu0 %v1208
      %1360 = vmatprep.subr.bf16.mxu0 %v1212
      %1361 = vmatpush1.bf16.msra.mxu0 %v1211
      %1362 = vmatprep.subr.bf16.mxu0 %v1215
      %1363 = vmatpush1.bf16.msra.mxu0 %v1214
      %1364 = vmatprep.subr.bf16.mxu0 %v1218
      %1365 = vmatpush1.bf16.msra.mxu0 %v1217
      %1366 = vmatprep.subr.bf16.mxu0 %v1221
      %1367 = vmatpush1.bf16.msra.mxu0 %v1220
      %1368 = vmatprep.subr.bf16.mxu0 %v1224
      %1369 = vmatpush1.bf16.msra.mxu0 %v1223
      %1370 = vmatprep.subr.bf16.mxu0 0
      %1371 = vmatpush1.bf16.msra.mxu0 0
      %1372 = vmatprep.subr.bf16.mxu0 0
      %1373 = vmatpush1.bf16.msra.mxu0 0
      %1374 = vmatprep.subr.bf16.mxu0 0
      %1375 = vmatpush1.bf16.msra.mxu0 0
      %1376 = vmatprep.subr.bf16.mxu0 0
      %1377 = vmatpush1.bf16.msra.mxu0 0
      %1378 = vmatprep.subr.bf16.mxu0 0
      %1379 = vmatpush1.bf16.msra.mxu0 0
      %1380 = vmatprep.subr.bf16.mxu0 0
      %1381 = vmatpush1.bf16.msra.mxu0 0
      %1382 = vmatprep.subr.bf16.mxu0 0
      %1383 = vmatpush1.bf16.msra.mxu0 0
      %1384 = vmatprep.subr.bf16.mxu0 0
      %1385 = vmatpush1.bf16.msra.mxu0 0
      %1386 = vmatprep.mubr.bf16.mxu0 0
      %1387 = vmatmul.mubr.bf16.gmra.mrb[0].mxu0 %v1338
      %v1388 = vpop.f32.mrb[0].mxu0
      %v1389 = vadd.f32 %v1244, %v1388
      %v1390 = vpop.f32.mrb[0].mxu0
      %v1391 = vadd.f32 %v1244, %v1390
      %v1392 = vpop.f32.mrb[0].mxu0
      %v1393 = vadd.f32 %v1248, %v1392
      %v1394 = vpop.f32.mrb[0].mxu0
      %v1395 = vadd.f32 %v1248, %v1394
      %1396 = vmatprep.mubr.bf16.mxu0 0
      %1397 = vmatmul.mubr.bf16.gmra.mrb[0].mxu0 %v1339
      %v1398 = vpop.f32.mrb[0].mxu0
      %v1399 = vadd.f32 %v1252, %v1398
      %v1400 = vpop.f32.mrb[0].mxu0
      %v1401 = vadd.f32 %v1252, %v1400
      %v1402 = vpop.f32.mrb[0].mxu0
      %v1403 = vadd.f32 %v1256, %v1402
      %v1404 = vpop.f32.mrb[0].mxu0
      %v1405 = vadd.f32 %v1256, %v1404
      %1406 = vmatprep.mubr.bf16.mxu0 0
      %1407 = vmatmul.mubr.bf16.gmra.mrb[0].mxu0 %v1340
      %v1408 = vpop.f32.mrb[0].mxu0
      %v1409 = vadd.f32 %v1260, %v1408
      %v1410 = vpop.f32.mrb[0].mxu0
      %v1411 = vadd.f32 %v1260, %v1410
      %v1412 = vpop.f32.mrb[0].mxu0
      %v1413 = vadd.f32 %v1264, %v1412
      %v1414 = vpop.f32.mrb[0].mxu0
      %v1415 = vadd.f32 %v1264, %v1414
      %1416 = vmatprep.mubr.bf16.mxu0 0
      %1417 = vmatmul.mubr.bf16.gmra.mrb[0].mxu0 %v1341
      %v1418 = vpop.f32.mrb[0].mxu0
      %v1419 = vadd.f32 %v1268, %v1418
      %v1420 = vpop.f32.mrb[0].mxu0
      %v1421 = vadd.f32 %v1268, %v1420
      %v1422 = vpop.f32.mrb[0].mxu0
      %v1423 = vadd.f32 %v1272, %v1422
      %v1424 = vpop.f32.mrb[0].mxu0
      %v1425 = vadd.f32 %v1272, %v1424
      %1426 = vmatprep.mubr.bf16.mxu0 0
      %1427 = vmatmul.mubr.bf16.gmra.mrb[0].mxu0 %v1342
      %v1428 = vpop.f32.mrb[0].mxu0
      %v1429 = vadd.f32 %v1276, %v1428
      %v1430 = vpop.f32.mrb[0].mxu0
      %v1431 = vadd.f32 %v1276, %v1430
      %v1432 = vpop.f32.mrb[0].mxu0
      %v1433 = vadd.f32 %v1280, %v1432
      %v1434 = vpop.f32.mrb[0].mxu0
      %v1435 = vadd.f32 %v1280, %v1434
      %1436 = vmatprep.mubr.bf16.mxu0 0
      %1437 = vmatmul.mubr.bf16.gmra.mrb[0].mxu0 %v1343
      %v1438 = vpop.f32.mrb[0].mxu0
      %v1439 = vadd.f32 %v1284, %v1438
      %v1440 = vpop.f32.mrb[0].mxu0
      %v1441 = vadd.f32 %v1284, %v1440
      %v1442 = vpop.f32.mrb[0].mxu0
      %v1443 = vadd.f32 %v1288, %v1442
      %v1444 = vpop.f32.mrb[0].mxu0
      %v1445 = vadd.f32 %v1288, %v1444
      %1446 = vmatprep.mubr.bf16.mxu0 0
      %1447 = vmatmul.mubr.bf16.gmra.mrb[0].mxu0 %v1344
      %v1448 = vpop.f32.mrb[0].mxu0
      %v1449 = vadd.f32 %v1292, %v1448
      %v1450 = vpop.f32.mrb[0].mxu0
      %v1451 = vadd.f32 %v1292, %v1450
      %v1452 = vpop.f32.mrb[0].mxu0
      %v1453 = vadd.f32 %v1296, %v1452
      %v1454 = vpop.f32.mrb[0].mxu0
      %v1455 = vadd.f32 %v1296, %v1454
      %1456 = vmatprep.mubr.bf16.mxu0 0
      %1457 = vmatmul.mubr.bf16.gmra.mrb[0].mxu0 %v1345
      %v1458 = vpop.f32.mrb[0].mxu0
      %v1459 = vadd.f32 %v1300, %v1458
      %v1460 = vpop.f32.mrb[0].mxu0
      %v1461 = vadd.f32 %v1300, %v1460
      %v1462 = vpop.f32.mrb[0].mxu0
      %v1463 = vadd.f32 %v1304, %v1462
      %v1464 = vpop.f32.mrb[0].mxu0
      %v1465 = vadd.f32 %v1304, %v1464
      %1466 = vdwg.mxu0
      %1467 = vmatprep.subr.bf16.mxu0 0
      %1468 = vmatpush1.bf16.msra.mxu0 %v1204
      %1469 = vmatprep.subr.bf16.mxu0 0
      %1470 = vmatpush1.bf16.msra.mxu0 %v1207
      %1471 = vmatprep.subr.bf16.mxu0 0
      %1472 = vmatpush1.bf16.msra.mxu0 %v1210
      %1473 = vmatprep.subr.bf16.mxu0 0
      %1474 = vmatpush1.bf16.msra.mxu0 %v1213
      %1475 = vmatprep.subr.bf16.mxu0 0
      %1476 = vmatpush1.bf16.msra.mxu0 %v1216
      %1477 = vmatprep.subr.bf16.mxu0 0
      %1478 = vmatpush1.bf16.msra.mxu0 %v1219
      %1479 = vmatprep.subr.bf16.mxu0 0
      %1480 = vmatpush1.bf16.msra.mxu0 %v1222
      %1481 = vmatprep.subr.bf16.mxu0 0
      %1482 = vmatpush1.bf16.msra.mxu0 %v1225
      %1483 = vmatprep.subr.bf16.mxu0 0
      %1484 = vmatpush1.bf16.msra.mxu0 0
      %1485 = vmatprep.subr.bf16.mxu0 0
      %1486 = vmatpush1.bf16.msra.mxu0 0
      %1487 = vmatprep.subr.bf16.mxu0 0
      %1488 = vmatpush1.bf16.msra.mxu0 0
      %1489 = vmatprep.subr.bf16.mxu0 0
      %1490 = vmatpush1.bf16.msra.mxu0 0
      %1491 = vmatprep.subr.bf16.mxu0 0
      %1492 = vmatpush1.bf16.msra.mxu0 0
      %1493 = vmatprep.subr.bf16.mxu0 0
      %1494 = vmatpush1.bf16.msra.mxu0 0
      %1495 = vmatprep.subr.bf16.mxu0 0
      %1496 = vmatpush1.bf16.msra.mxu0 0
      %1497 = vmatprep.subr.bf16.mxu0 0
      %1498 = vmatpush1.bf16.msra.mxu0 0
      %1499 = vmatprep.mubr.bf16.mxu0 0
      %1500 = vmatmul.mubr.bf16.gmra.mrb[0].mxu0 %v1338
      %v1501 = vpop.f32.mrb[0].mxu0
      %v1502 = vadd.f32 %v1244, %v1501
      %v1503 = vpop.f32.mrb[0].mxu0
      %v1504 = vpop.f32.mrb[0].mxu0
      %v1505 = vadd.f32 %v1248, %v1504
      %v1506 = vpop.f32.mrb[0].mxu0
      %1507 = vmatprep.mubr.bf16.mxu0 0
      %1508 = vmatmul.mubr.bf16.gmra.mrb[0].mxu0 %v1339
      %v1509 = vpop.f32.mrb[0].mxu0
      %v1510 = vadd.f32 %v1252, %v1509
      %v1511 = vpop.f32.mrb[0].mxu0
      %v1512 = vpop.f32.mrb[0].mxu0
      %v1513 = vadd.f32 %v1256, %v1512
      %v1514 = vpop.f32.mrb[0].mxu0
      %1515 = vmatprep.mubr.bf16.mxu0 0
      %1516 = vmatmul.mubr.bf16.gmra.mrb[0].mxu0 %v1340
      %v1517 = vpop.f32.mrb[0].mxu0
      %v1518 = vadd.f32 %v1260, %v1517
      %v1519 = vpop.f32.mrb[0].mxu0
      %v1520 = vpop.f32.mrb[0].mxu0
      %v1521 = vadd.f32 %v1264, %v1520
      %v1522 = vpop.f32.mrb[0].mxu0
      %1523 = vmatprep.mubr.bf16.mxu0 0
      %1524 = vmatmul.mubr.bf16.gmra.mrb[0].mxu0 %v1341
      %v1525 = vpop.f32.mrb[0].mxu0
      %v1526 = vadd.f32 %v1268, %v1525
      %v1527 = vpop.f32.mrb[0].mxu0
      %v1528 = vpop.f32.mrb[0].mxu0
      %v1529 = vadd.f32 %v1272, %v1528
      %v1530 = vpop.f32.mrb[0].mxu0
      %1531 = vmatprep.mubr.bf16.mxu0 0
      %1532 = vmatmul.mubr.bf16.gmra.mrb[0].mxu0 %v1342
      %v1533 = vpop.f32.mrb[0].mxu0
      %v1534 = vadd.f32 %v1276, %v1533
      %v1535 = vpop.f32.mrb[0].mxu0
      %v1536 = vpop.f32.mrb[0].mxu0
      %v1537 = vadd.f32 %v1280, %v1536
      %v1538 = vpop.f32.mrb[0].mxu0
      %1539 = vmatprep.mubr.bf16.mxu0 0
      %1540 = vmatmul.mubr.bf16.gmra.mrb[0].mxu0 %v1343
      %v1541 = vpop.f32.mrb[0].mxu0
      %v1542 = vadd.f32 %v1284, %v1541
      %v1543 = vpop.f32.mrb[0].mxu0
      %v1544 = vpop.f32.mrb[0].mxu0
      %v1545 = vadd.f32 %v1288, %v1544
      %v1546 = vpop.f32.mrb[0].mxu0
      %1547 = vmatprep.mubr.bf16.mxu0 0
      %1548 = vmatmul.mubr.bf16.gmra.mrb[0].mxu0 %v1344
      %v1549 = vpop.f32.mrb[0].mxu0
      %v1550 = vadd.f32 %v1292, %v1549
      %v1551 = vpop.f32.mrb[0].mxu0
      %v1552 = vpop.f32.mrb[0].mxu0
      %v1553 = vadd.f32 %v1296, %v1552
      %v1554 = vpop.f32.mrb[0].mxu0
      %1555 = vmatprep.mubr.bf16.mxu0 0
      %1556 = vmatmul.mubr.bf16.gmra.mrb[0].mxu0 %v1345
      %v1557 = vpop.f32.mrb[0].mxu0
      %v1558 = vadd.f32 %v1300, %v1557
      %v1559 = vpop.f32.mrb[0].mxu0
      %v1560 = vpop.f32.mrb[0].mxu0
      %v1561 = vadd.f32 %v1304, %v1560
      %v1562 = vpop.f32.mrb[0].mxu0
      %1563 = vdwg.mxu0
      %v1564 = vmul.f32 %v1389, 0.01
      %v1565 = vmul.f32 %v1391, 0.01
      %v1566 = vmul.f32 %v1502, 0.01
      %v1567 = vmul.f32 %v1393, 0.01
      %v1568 = vmul.f32 %v1395, 0.01
      %v1569 = vmul.f32 %v1505, 0.01
      %v1570 = vmul.f32 %v1399, 0.01
      %v1571 = vmul.f32 %v1401, 0.01
      %v1572 = vmul.f32 %v1510, 0.01
      %v1573 = vmul.f32 %v1403, 0.01
      %v1574 = vmul.f32 %v1405, 0.01
      %v1575 = vmul.f32 %v1513, 0.01
      %v1576 = vmul.f32 %v1409, 0.01
      %v1577 = vmul.f32 %v1411, 0.01
      %v1578 = vmul.f32 %v1518, 0.01
      %v1579 = vmul.f32 %v1413, 0.01
      %v1580 = vmul.f32 %v1415, 0.01
      %v1581 = vmul.f32 %v1521, 0.01
      %v1582 = vmul.f32 %v1419, 0.01
      %v1583 = vmul.f32 %v1421, 0.01
      %v1584 = vmul.f32 %v1526, 0.01
      %v1585 = vmul.f32 %v1423, 0.01
      %v1586 = vmul.f32 %v1425, 0.01
      %v1587 = vmul.f32 %v1529, 0.01
      %v1588 = vmul.f32 %v1429, 0.01
      %v1589 = vmul.f32 %v1431, 0.01
      %v1590 = vmul.f32 %v1534, 0.01
      %v1591 = vmul.f32 %v1433, 0.01
      %v1592 = vmul.f32 %v1435, 0.01
      %v1593 = vmul.f32 %v1537, 0.01
      %v1594 = vmul.f32 %v1439, 0.01
      %v1595 = vmul.f32 %v1441, 0.01
      %v1596 = vmul.f32 %v1542, 0.01
      %v1597 = vmul.f32 %v1443, 0.01
      %v1598 = vmul.f32 %v1445, 0.01
      %v1599 = vmul.f32 %v1545, 0.01
      %v1600 = vmul.f32 %v1449, 0.01
      %v1601 = vmul.f32 %v1451, 0.01
      %v1602 = vmul.f32 %v1550, 0.01
      %v1603 = vmul.f32 %v1453, 0.01
      %v1604 = vmul.f32 %v1455, 0.01
      %v1605 = vmul.f32 %v1553, 0.01
      %v1606 = vmul.f32 %v1459, 0.01
      %v1607 = vmul.f32 %v1461, 0.01
      %v1608 = vmul.f32 %v1558, 0.01
      %v1609 = vmul.f32 %v1463, 0.01
      %v1610 = vmul.f32 %v1465, 0.01
      %v1611 = vmul.f32 %v1561, 0.01
      %v1612 = vmax.f32 %v1389, %v1564
      %v1613 = vmax.f32 %v1391, %v1565
      %v1614 = vmax.f32 %v1502, %v1566
      %v1615 = vmax.f32 %v1393, %v1567
      %v1616 = vmax.f32 %v1395, %v1568
      %v1617 = vmax.f32 %v1505, %v1569
      %v1618 = vmax.f32 %v1399, %v1570
      %v1619 = vmax.f32 %v1401, %v1571
      %v1620 = vmax.f32 %v1510, %v1572
      %v1621 = vmax.f32 %v1403, %v1573
      %v1622 = vmax.f32 %v1405, %v1574
      %v1623 = vmax.f32 %v1513, %v1575
      %v1624 = vmax.f32 %v1409, %v1576
      %v1625 = vmax.f32 %v1411, %v1577
      %v1626 = vmax.f32 %v1518, %v1578
      %v1627 = vmax.f32 %v1413, %v1579
      %v1628 = vmax.f32 %v1415, %v1580
      %v1629 = vmax.f32 %v1521, %v1581
      %v1630 = vmax.f32 %v1419, %v1582
      %v1631 = vmax.f32 %v1421, %v1583
      %v1632 = vmax.f32 %v1526, %v1584
      %v1633 = vmax.f32 %v1423, %v1585
      %v1634 = vmax.f32 %v1425, %v1586
      %v1635 = vmax.f32 %v1529, %v1587
      %v1636 = vmax.f32 %v1429, %v1588
      %v1637 = vmax.f32 %v1431, %v1589
      %v1638 = vmax.f32 %v1534, %v1590
      %v1639 = vmax.f32 %v1433, %v1591
      %v1640 = vmax.f32 %v1435, %v1592
      %v1641 = vmax.f32 %v1537, %v1593
      %v1642 = vmax.f32 %v1439, %v1594
      %v1643 = vmax.f32 %v1441, %v1595
      %v1644 = vmax.f32 %v1542, %v1596
      %v1645 = vmax.f32 %v1443, %v1597
      %v1646 = vmax.f32 %v1445, %v1598
      %v1647 = vmax.f32 %v1545, %v1599
      %v1648 = vmax.f32 %v1449, %v1600
      %v1649 = vmax.f32 %v1451, %v1601
      %v1650 = vmax.f32 %v1550, %v1602
      %v1651 = vmax.f32 %v1453, %v1603
      %v1652 = vmax.f32 %v1455, %v1604
      %v1653 = vmax.f32 %v1553, %v1605
      %v1654 = vmax.f32 %v1459, %v1606
      %v1655 = vmax.f32 %v1461, %v1607
      %v1656 = vmax.f32 %v1558, %v1608
      %v1657 = vmax.f32 %v1463, %v1609
      %v1658 = vmax.f32 %v1465, %v1610
      %v1659 = vmax.f32 %v1561, %v1611
      %v1660 = vpack.c.bf16 %v1615, %v1612
      %v1661 = vpack.c.bf16 %v1616, %v1613
      %v1662 = vpack.c.bf16 %v1617, %v1614
      %v1663 = vpack.c.bf16 %v1621, %v1618
      %v1664 = vpack.c.bf16 %v1622, %v1619
      %v1665 = vpack.c.bf16 %v1623, %v1620
      %v1666 = vpack.c.bf16 %v1627, %v1624
      %v1667 = vpack.c.bf16 %v1628, %v1625
      %v1668 = vpack.c.bf16 %v1629, %v1626
      %v1669 = vpack.c.bf16 %v1633, %v1630
      %v1670 = vpack.c.bf16 %v1634, %v1631
      %v1671 = vpack.c.bf16 %v1635, %v1632
      %v1672 = vpack.c.bf16 %v1639, %v1636
      %v1673 = vpack.c.bf16 %v1640, %v1637
      %v1674 = vpack.c.bf16 %v1641, %v1638
      %v1675 = vpack.c.bf16 %v1645, %v1642
      %v1676 = vpack.c.bf16 %v1646, %v1643
      %v1677 = vpack.c.bf16 %v1647, %v1644
      %v1678 = vpack.c.bf16 %v1651, %v1648
      %v1679 = vpack.c.bf16 %v1652, %v1649
      %v1680 = vpack.c.bf16 %v1653, %v1650
      %v1681 = vpack.c.bf16 %v1657, %v1654
      %v1682 = vpack.c.bf16 %v1658, %v1655
      %v1683 = vpack.c.bf16 %v1659, %v1656
      %v1684 = vld [vmem:[%s4] sm:$0xf]
      %v1685 = vld [vmem:[%s5] sm:$0xff]
      %1687 = vset.pattern.permute.xlu0 2
      %1688 = vperm.xlu0 %1687, %v1685
      %v1689 = vpop.permute.xlu0 %1688
      %1691 = vmatprep.subr.bf16.mxu0 %v1661
      %1692 = vmatpush1.bf16.msra.mxu0 %v1660
      %1693 = vmatprep.subr.bf16.mxu0 %v1664
      %1694 = vmatpush1.bf16.msra.mxu0 %v1663
      %1695 = vmatprep.subr.bf16.mxu0 %v1667
      %1696 = vmatpush1.bf16.msra.mxu0 %v1666
      %1697 = vmatprep.subr.bf16.mxu0 %v1670
      %1698 = vmatpush1.bf16.msra.mxu0 %v1669
      %1699 = vmatprep.subr.bf16.mxu0 %v1673
      %1700 = vmatpush1.bf16.msra.mxu0 %v1672
      %1701 = vmatprep.subr.bf16.mxu0 %v1676
      %1702 = vmatpush1.bf16.msra.mxu0 %v1675
      %1703 = vmatprep.subr.bf16.mxu0 %v1679
      %1704 = vmatpush1.bf16.msra.mxu0 %v1678
      %1705 = vmatprep.subr.bf16.mxu0 %v1682
      %1706 = vmatpush1.bf16.msra.mxu0 %v1681
      %1707 = vmatprep.subr.bf16.mxu0 0
      %1708 = vmatpush1.bf16.msra.mxu0 0
      %1709 = vmatprep.subr.bf16.mxu0 0
      %1710 = vmatpush1.bf16.msra.mxu0 0
      %1711 = vmatprep.subr.bf16.mxu0 0
      %1712 = vmatpush1.bf16.msra.mxu0 0
      %1713 = vmatprep.subr.bf16.mxu0 0
      %1714 = vmatpush1.bf16.msra.mxu0 0
      %1715 = vmatprep.subr.bf16.mxu0 0
      %1716 = vmatpush1.bf16.msra.mxu0 0
      %1717 = vmatprep.subr.bf16.mxu0 0
      %1718 = vmatpush1.bf16.msra.mxu0 0
      %1719 = vmatprep.subr.bf16.mxu0 0
      %1720 = vmatpush1.bf16.msra.mxu0 0
      %1721 = vmatprep.subr.bf16.mxu0 0
      %1722 = vmatpush1.bf16.msra.mxu0 0
      %1723 = vmatprep.mubr.bf16.mxu0 0
      %1724 = vmatmul.mubr.bf16.gmra.mrb[0].mxu0 %v1684
      %v1725 = vpop.f32.mrb[0].mxu0
      %v1726 = vadd.f32 %v1689, %v1725
      %v1727 = vpop.f32.mrb[0].mxu0
      %v1728 = vadd.f32 %v1689, %v1727
      %v1729 = vpop.f32.mrb[0].mxu0
      %v1730 = vpop.f32.mrb[0].mxu0
      %1731 = vdwg.mxu0
      %1732 = vmatprep.subr.bf16.mxu0 0
      %1733 = vmatpush1.bf16.msra.mxu0 %v1662
      %1734 = vmatprep.subr.bf16.mxu0 0
      %1735 = vmatpush1.bf16.msra.mxu0 %v1665
      %1736 = vmatprep.subr.bf16.mxu0 0
      %1737 = vmatpush1.bf16.msra.mxu0 %v1668
      %1738 = vmatprep.subr.bf16.mxu0 0
      %1739 = vmatpush1.bf16.msra.mxu0 %v1671
      %1740 = vmatprep.subr.bf16.mxu0 0
      %1741 = vmatpush1.bf16.msra.mxu0 %v1674
      %1742 = vmatprep.subr.bf16.mxu0 0
      %1743 = vmatpush1.bf16.msra.mxu0 %v1677
      %1744 = vmatprep.subr.bf16.mxu0 0
      %1745 = vmatpush1.bf16.msra.mxu0 %v1680
      %1746 = vmatprep.subr.bf16.mxu0 0
      %1747 = vmatpush1.bf16.msra.mxu0 %v1683
      %1748 = vmatprep.subr.bf16.mxu0 0
      %1749 = vmatpush1.bf16.msra.mxu0 0
      %1750 = vmatprep.subr.bf16.mxu0 0
      %1751 = vmatpush1.bf16.msra.mxu0 0
      %1752 = vmatprep.subr.bf16.mxu0 0
      %1753 = vmatpush1.bf16.msra.mxu0 0
      %1754 = vmatprep.subr.bf16.mxu0 0
      %1755 = vmatpush1.bf16.msra.mxu0 0
      %1756 = vmatprep.subr.bf16.mxu0 0
      %1757 = vmatpush1.bf16.msra.mxu0 0
      %1758 = vmatprep.subr.bf16.mxu0 0
      %1759 = vmatpush1.bf16.msra.mxu0 0
      %1760 = vmatprep.subr.bf16.mxu0 0
      %1761 = vmatpush1.bf16.msra.mxu0 0
      %1762 = vmatprep.subr.bf16.mxu0 0
      %1763 = vmatpush1.bf16.msra.mxu0 0
      %1764 = vmatprep.mubr.bf16.mxu0 0
      %1765 = vmatmul.mubr.bf16.gmra.mrb[0].mxu0 %v1684
      %v1766 = vpop.f32.mrb[0].mxu0
      %v1767 = vadd.f32 %v1689, %v1766
      %v1768 = vpop.f32.mrb[0].mxu0
      %v1769 = vpop.f32.mrb[0].mxu0
      %v1770 = vpop.f32.mrb[0].mxu0
      %1771 = vdwg.mxu0
      %v1775 = vcombine.low %v1726, %v1728
      %v1777 = vunpack.c.l.s4 1966171168
      %v1778 = vunpack.c.0.s8 %v1777
      %v1779 = vlaneseq
      %v1780 = vshrl.u32 %v1779, 7
      %v1781 = vsub.s32 %v1778, %v1780
      %v1782 = vrot.slane %v1775, %v1781
      %v1784 = vunpack.c.l.s4 1966171168
      %v1785 = vunpack.c.0.s8 %v1784
      %v1786 = vlaneseq
      %v1787 = vshrl.u32 %v1786, 7
      %v1788 = vsub.s32 %v1785, %v1787
      %v1789 = vrot.slane %v1767, %v1788
      %v1790 = vcombine.low %v1782, %v1789
      %v1792 = vunpack.c.l.s4 1966171168
      %v1793 = vunpack.c.0.s8 %v1792
      %v1794 = vlaneseq
      %v1795 = vshrl.u32 %v1794, 7
      %v1796 = vsub.s32 %v1793, %v1795
      %v1797 = vrot.slane %v1790, %v1796
      %v1799 = vlaneseq
      %vm1800 = vcmp.ge.s32.totalorder %v1799, 0
      %vm1801 = vcmp.lt.s32.totalorder %v1799, 289
      %vm1802 = vmand %vm1800, %vm1801
      %1803 = vst.msk [vmem:[%s368] sm:$0x7] %vm1802, %v1797
      %v1805 = vunpack.c.l.s4 1983009808
      %v1806 = vunpack.c.0.s8 %v1805
      %v1807 = vlaneseq
      %v1808 = vshrl.u32 %v1807, 7
      %v1809 = vsub.s32 %v1806, %v1808
      %v1810 = vrot.slane %v1775, %v1809
      %v1812 = vunpack.c.l.s4 1983009808
      %v1813 = vunpack.c.0.s8 %v1812
      %v1814 = vlaneseq
      %v1815 = vshrl.u32 %v1814, 7
      %v1816 = vsub.s32 %v1813, %v1815
      %v1817 = vrot.slane %v1767, %v1816
      %v1818 = vcombine.low %v1810, %v1817
      %v1819 = vcombine.high %v1810, %v1817
      %vm1820 = vcmask 1040384
      %vm1821 = vcmask 1042434
      %vm1822 = vmor %vm1820, %vm1821
      %vm1823 = vcmask 1044484
      %vm1824 = vmor %vm1822, %vm1823
      %vm1825 = vcmask 1046534
      %vm1826 = vmor %vm1824, %vm1825
      %v1827 = vrot.slane %v1818, 7
      %v1828 = vrot.slane %v1827, 2
      %v1829 = vrot.slane %v1819, 7
      %v1830 = vsel %vm1826, %v1828, %v1829
      %vm1832 = vcmask 1041408
      %vm1833 = vcmask 1043458
      %vm1834 = vmor %vm1833, %vm1832
      %vm1835 = vcmask 267268
      %vm1836 = vmor %vm1835, %vm1834
      %1837 = vst.msk [vmem:[%s377] sm:$0x3f] %vm1836, %v1830
      %v1838 = vcombine.high %v1726, %v1728
      %v1839 = vcombine.high %v1767, %v1767
      %vm1840 = vmor %vm1820, %vm1823
      %v1841 = vrot.slane %v1775, 7
      %v1842 = vrot.slane %v1841, 4
      %v1843 = vrot.slane %v1838, 7
      %v1844 = vsel %vm1840, %v1842, %v1843
      %v1845 = vrot.slane %v1767, 7
      %v1846 = vrot.slane %v1845, 4
      %v1847 = vrot.slane %v1839, 7
      %v1848 = vsel %vm1840, %v1846, %v1847
      %1851 = vst [vmem:[%s382] sm:$0xff] %v1844
      %vm1852 = vcmask 265216
      %1853 = vst.msk [vmem:[%s382 + $0x8] sm:$0xf] %vm1852, %v1848
      %v1854 = vld [vmem:[%s364] sm:$0x7]
      %v1856 = vlaneseq
      %v1857 = vshrl.u32 %v1856, 7
      %v1858 = vsub.s32 0, %v1857
      %v1859 = vrot.slane %v1854, %v1858
      %v1860 = vlaneseq
      %v1861 = vshrl.u32 %v1860, 7
      %v1862 = vsub.s32 1, %v1861
      %v1863 = vrot.slane %v1854, %v1862
      %v1864 = vlaneseq
      %v1865 = vshrl.u32 %v1864, 7
      %v1866 = vsub.s32 2, %v1865
      %v1867 = vrot.slane %v1854, %v1866
      %v1871 = vadd.f32 %v1726, %v1859
      %v1872 = vadd.f32 %v1728, %v1863
      %v1873 = vadd.f32 %v1767, %v1867
      %v1874 = vsel %vm1820, %v1871, -inf
      %v1875 = vsel %vm1820, %v1872, -inf
      %vm1876 = vcmask 262144
      %v1877 = vsel %vm1876, %v1873, -inf
      %v1878 = vmax.f32 %v1874, %v1875
      %v1879 = vmax.f32 %v1878, %v1877
      %1880 = vmax.xlane.f32.xlu0 %v1879
      %v1881 = vpop.xlane.xlu0 %1880
      %v1882 = vsub.f32 %v1871, %v1881
      %v1883 = vsub.f32 %v1872, %v1881
      %v1884 = vsub.f32 %v1873, %v1881
      %v1885 = vmul.f32 %v1882, 1.442695
      %v1886 = vpow.pop %v1885
      %v1887 = vmul.f32 %v1883, 1.442695
      %v1888 = vpow.pop %v1887
      %v1889 = vmul.f32 %v1884, 1.442695
      %v1890 = vpow.pop %v1889
      %v1891 = vsel %vm1820, %v1886, 0.0
      %v1892 = vsel %vm1820, %v1888, 0.0
      %v1893 = vadd.f32 %v1891, %v1892
      %v1894 = vsel %vm1876, %v1890, 0.0
      %v1895 = vadd.f32 %v1893, %v1894
      %1896 = vadd.xlane.f32.xlu0 %v1895
      %v1897 = vpop.xlane.xlu0 %1896
      %v1898 = vrcp.pop %v1897
      %v1899 = vmul.f32 %v1886, %v1898
      %v1900 = vmul.f32 %v1888, %v1898
      %v1901 = vmul.f32 %v1890, %v1898
      %v1905 = vcombine.low %v1899, %v1900
      %v1907 = vunpack.c.l.s4 1966171168
      %v1908 = vunpack.c.0.s8 %v1907
      %v1909 = vlaneseq
      %v1910 = vshrl.u32 %v1909, 7
      %v1911 = vsub.s32 %v1908, %v1910
      %v1912 = vrot.slane %v1905, %v1911
      %v1914 = vunpack.c.l.s4 1966171168
      %v1915 = vunpack.c.0.s8 %v1914
      %v1916 = vlaneseq
      %v1917 = vshrl.u32 %v1916, 7
      %v1918 = vsub.s32 %v1915, %v1917
      %v1919 = vrot.slane %v1901, %v1918
      %v1920 = vcombine.low %v1912, %v1919
      %v1922 = vunpack.c.l.s4 1966171168
      %v1923 = vunpack.c.0.s8 %v1922
      %v1924 = vlaneseq
      %v1925 = vshrl.u32 %v1924, 7
      %v1926 = vsub.s32 %v1923, %v1925
      %v1927 = vrot.slane %v1920, %v1926
      %1929 = vst.msk [vmem:[%s372] sm:$0x7] %vm1802, %v1927
      %p1930 = scmp.lt.s32.totalorder %s21, 1
      %s1931 = scalar_select %p1930, %s21, 1
      %s1932 = smul.addr %s1931, 3
      %s1933 = scalar_lea.vmem %s6, %s1932
      %p1934 = scmp.lt.s32.totalorder %s21, 1
      %s1935 = scalar_select %p1934, %s21, 1
      %s1936 = smul.addr %s1935, 3
      %s1937 = scalar_lea.vmem %s7, %s1936
      %p1938 = scmp.lt.s32.totalorder %s21, 1
      %s1939 = scalar_select %p1938, %s21, 1
      %s1940 = smul.addr %s1939, 3
      %s1941 = smul.addr %s1940, 2
      %s1942 = scalar_lea.vmem %s8, %s1941
      %p1943 = scmp.lt.s32.totalorder %s21, 1
      %s1944 = scalar_select %p1943, %s21, 1
      %s1945 = smul.addr %s1944, 3
      %s1946 = smul.addr %s1945, 4
      %s1947 = scalar_lea.vmem %s9, %s1946
      // Predicated region
      $region45: #{inference_forward.1} parent=43 // pred_check
        %p1948 = pneg %p175
      $region46: #{inference_forward.1} parent=43 // pred_check_branch
        %1950 = sbr.rel (%p1948) target = $region48
      $region47: #{inference_forward.1} parent=43 // pred_region
        _
      $region48: #{inference_forward.1} parent=43 // pred_fallthru
        _
      // Predicated region
      $region49: #{inference_forward.1} parent=43 // pred_check
        %p1951 = pneg %p201
      $region50: #{inference_forward.1} parent=43 // pred_check_branch
        %1953 = sbr.rel (%p1951) target = $region52
      $region51: #{inference_forward.1} parent=43 // pred_region
        _
      $region52: #{inference_forward.1} parent=43 // pred_fallthru
        _
      // Predicated region
      $region53: #{inference_forward.1} parent=43 // pred_check
        %p1954 = pneg %p227
      $region54: #{inference_forward.1} parent=43 // pred_check_branch
        %1956 = sbr.rel (%p1954) target = $region56
      $region55: #{inference_forward.1} parent=43 // pred_region
        _
      $region56: #{inference_forward.1} parent=43 // pred_fallthru
        _
      // Predicated region
      $region57: #{inference_forward.1} parent=43 // pred_check
        %p1957 = pneg %p253
      $region58: #{inference_forward.1} parent=43 // pred_check_branch
        %1959 = sbr.rel (%p1957) target = $region60
      $region59: #{inference_forward.1} parent=43 // pred_region
        _
      $region60: #{inference_forward.1} parent=43 // pred_fallthru
        _
    $region44: #{inference_forward.1} parent=5 // pred_fallthru
      _
    %p1960 = scmp.le.s32.totalorder 2, %s16
    // Predicated region
    $region61: #{inference_forward.1} parent=5 // pred_check
      %p1961 = pneg %p1960
    $region62: #{inference_forward.1} parent=5 // pred_check_branch
      %1963 = sbr.rel (%p1961) target = $region64
    $region63: #{inference_forward.1} parent=5 // pred_region
      %s1964 = ssub.s32 %s16, 2
      // Predicated region
      $region65: #{inference_forward.1} parent=63 // pred_check
        %p1965 = pneg %p181
      $region66: #{inference_forward.1} parent=63 // pred_check_branch
        %1967 = sbr.rel (%p1965) target = $region68
      $region67: #{inference_forward.1} parent=63 // pred_region
        %p1968 = scmp.lt.s32.totalorder %s22, 1
        %s1969 = scalar_select %p1968, %s22, 1
        %s1970 = smul.addr %s1969, 3
        %s1971 = scalar_lea.vmem %s6, %s1970
      $region68: #{inference_forward.1} parent=63 // pred_fallthru
        _
      // Predicated region
      $region69: #{inference_forward.1} parent=63 // pred_check
        %p1972 = pneg %p207
      $region70: #{inference_forward.1} parent=63 // pred_check_branch
        %1974 = sbr.rel (%p1972) target = $region72
      $region71: #{inference_forward.1} parent=63 // pred_region
        %p1975 = scmp.lt.s32.totalorder %s22, 1
        %s1976 = scalar_select %p1975, %s22, 1
        %s1977 = smul.addr %s1976, 3
        %s1978 = scalar_lea.vmem %s7, %s1977
      $region72: #{inference_forward.1} parent=63 // pred_fallthru
        _
      // Predicated region
      $region73: #{inference_forward.1} parent=63 // pred_check
        %p1979 = pneg %p233
      $region74: #{inference_forward.1} parent=63 // pred_check_branch
        %1981 = sbr.rel (%p1979) target = $region76
      $region75: #{inference_forward.1} parent=63 // pred_region
        %p1982 = scmp.lt.s32.totalorder %s22, 1
        %s1983 = scalar_select %p1982, %s22, 1
        %s1984 = smul.addr %s1983, 3
        %s1985 = smul.addr %s1984, 2
        %s1986 = scalar_lea.vmem %s8, %s1985
      $region76: #{inference_forward.1} parent=63 // pred_fallthru
        _
      // Predicated region
      $region77: #{inference_forward.1} parent=63 // pred_check
        %p1987 = pneg %p259
      $region78: #{inference_forward.1} parent=63 // pred_check_branch
        %1989 = sbr.rel (%p1987) target = $region80
      $region79: #{inference_forward.1} parent=63 // pred_region
        %p1990 = scmp.lt.s32.totalorder %s22, 1
        %s1991 = scalar_select %p1990, %s22, 1
        %s1992 = smul.addr %s1991, 3
        %s1993 = smul.addr %s1992, 4
        %s1994 = scalar_lea.vmem %s9, %s1993
      $region80: #{inference_forward.1} parent=63 // pred_fallthru
        _
    $region64: #{inference_forward.1} parent=5 // pred_fallthru
      _
  $region6: #{inference_forward.1} parent=0 // loop_footer
    %s20 = sadd.s32 1, %s16
  $region7: #{inference_forward.1} parent=0 // loop_footer_branch
    %15 = sbr.rel target = $region3
  $region8: #{inference_forward.1} parent=0 // loop_exit
    _

</llo_original>
